<compile_context>
chip_gen: v7x
topology: tpu7x:2x2x1
jax: 0.10.0
libtpu: 0.0.40
codegen_flags: <defaults>
</compile_context>

<pallas_src>
import math
import functools

import jax
import jax.numpy as jnp
from jax.experimental import pallas as pl
from jax.experimental.pallas import tpu as pltpu


def _encoder_layer_kernel(x_ref,
                          wq_ref, bq_ref, wk_ref, bk_ref, wv_ref, bv_ref,
                          wo_ref, bo_ref,
                          g1_ref, be1_ref,
                          w1_ref, b1_ref, w2_ref, b2_ref,
                          g2_ref, be2_ref,
                          o_ref, ctx_ref,
                          *, num_heads, matmul_dtype, q_tile, approx_recip):
    f32 = jnp.float32
    md = matmul_dtype
    block_b, seq_len, d_token = x_ref.shape
    d_k = d_token // num_heads
    n_rows = block_b * seq_len
    n_q_tiles = seq_len // q_tile            # wrapper guarantees q_tile | seq_len

    # ---- hoist small parameters once (no per-loop re-broadcasts) ----
    bq = bq_ref[...].astype(f32)
    bk = bk_ref[...].astype(f32)
    bv = bv_ref[...].astype(f32)
    bo = bo_ref[...].astype(f32)
    b2 = b2_ref[...].astype(f32)
    g1 = g1_ref[...].astype(f32)
    be1 = be1_ref[...].astype(f32)
    g2 = g2_ref[...].astype(f32)
    be2 = be2_ref[...].astype(f32)
    b1c = b1_ref[...].astype(f32)            # (n_ff_chunks, 1, C)

    x = x_ref[...].astype(f32)               # (Bb, S, D)
    xf = x.reshape(n_rows, d_token)          # fold batch rows into the matmul M dim
    xm = xf.astype(md)

    def mm(a, w):                             # MXU matmul, f32 accumulation
        return jnp.dot(a, w, preferred_element_type=f32)

    # ---- QKV projections: one (B*S, D) x (D, D) matmul each ----
    # (softmax scale 1/sqrt(d_k) pre-folded into wq / bq on the host)
    q3 = (mm(xm, wq_ref[...]) + bq).astype(md).reshape(block_b, seq_len, d_token)
    k3 = (mm(xm, wk_ref[...]) + bk).astype(md).reshape(block_b, seq_len, d_token)
    v3 = (mm(xm, wv_ref[...]) + bv).astype(md).reshape(block_b, seq_len, d_token)

    # ---- attention ----
    # Static head loop x static q-row tiling: the (Bb, q_tile, S) f32 score/exp
    # temporaries never live in full.  Each head's context is written into its lane
    # range of the VMEM scratch `ctx_ref`, so the out-projection below is a single
    # MXU-efficient K=D matmul instead of H narrow K=d_k matmuls.
    for h in range(num_heads):
        lanes = slice(h * d_k, (h + 1) * d_k)
        kh = k3[:, :, lanes]                  # (Bb, S, d_k)
        vh = v3[:, :, lanes]
        qh_all = q3[:, :, lanes]
        for t in range(n_q_tiles):
            rows = slice(t * q_tile, (t + 1) * q_tile)
            qh = qh_all[:, rows, :]           # (Bb, Tq, d_k)
            s = jnp.einsum('bqd,bkd->bqk', qh, kh,
                           preferred_element_type=f32)       # (Bb, Tq, S)
            s = s - jnp.max(s, axis=-1, keepdims=True)        # softmax in f32
            e = jnp.exp(s)
            denom = jnp.sum(e, axis=-1, keepdims=True)
            if approx_recip:                  # optional inference knob (EUP slot)
                p = e * pl.reciprocal(denom, approx=True)
            else:
                p = e / denom                 # exact: matches the reference
            ctx = jnp.einsum('bqk,bkd->bqd', p.astype(md), vh,
                             preferred_element_type=f32)     # (Bb, Tq, d_k)
            ctx_ref[:, rows, lanes] = ctx.astype(md)

    # ---- merged out-projection: one (B*S, D) x (D, D) matmul ----
    attn_out = mm(ctx_ref[...].reshape(n_rows, d_token), wo_ref[...]) + bo

    def layernorm(v, g, b):
        mu = jnp.mean(v, axis=-1, keepdims=True)
        var = jnp.mean((v - mu) ** 2, axis=-1, keepdims=True)
        return (v - mu) * jax.lax.rsqrt(var + 1e-5) * g + b

    # residual + LayerNorm 1 (dropout1 == identity at inference)
    h1 = layernorm(attn_out + xf, g1, be1)
    h1m = h1.astype(md)

    # ---- feed-forward, chunked over d_ff (weights pre-split on the host) ----
    # bounds the (B*S, C) f32 hidden intermediate; no in-kernel lane slicing.
    n_ff_chunks = w1_ref.shape[0]
    ff = jnp.zeros((n_rows, d_token), f32)
    for c in range(n_ff_chunks):
        hid = jnp.maximum(mm(h1m, w1_ref[c]) + b1c[c], 0.0)   # (B*S, C), ReLU
        ff = ff + mm(hid.astype(md), w2_ref[c])
    ff = ff + b2

    # residual + LayerNorm 2 (dropout2 == identity)
    h2 = layernorm(ff + h1, g2, be2)
    o_ref[...] = h2.reshape(block_b, seq_len, d_token).astype(o_ref.dtype)


def _largest_divisor_leq(n, cap):
    cap = max(1, min(cap, n))
    for d in range(cap, 0, -1):
        if n % d == 0:
            return d
    return 1


def _const_spec(shape):
    """Weight/bias spec: constant index_map.  Single-buffered when supported —
    the block never changes, so double-buffering would only waste VMEM."""
    idx = lambda b: (0,) * len(shape)
    try:
        return pl.BlockSpec(shape, idx, pipeline_mode=pl.Buffered(1))
    except (TypeError, AttributeError):
        return pl.BlockSpec(shape, idx)


def _default_vmem_limit_bytes():
    # v5e/v6e: 128 MiB physical VMEM -> allow big resident blocks;
    # v7x: 64 MiB physical -> leave the compiler headroom.
    try:
        kind = jax.devices()[0].device_kind.lower()
    except Exception:
        kind = ""
    if "v5" in kind or "v6" in kind:
        return 96 * 1024 * 1024
    if "v7" in kind or "7x" in kind:
        return 48 * 1024 * 1024
    return 64 * 1024 * 1024


def encoder_layer(x, params, num_heads, *,
                  block_b=None,
                  matmul_dtype=jnp.bfloat16,
                  q_tile=256,
                  ff_chunk=512,
                  approx_softmax_recip=False,
                  vmem_limit_bytes=None):
    """EncoderLayer forward.  `params` use PyTorch layout: Linear W is (out, in),
    biases / LayerNorm params are stored as (1, out).

    Matmul operands are cast to `matmul_dtype` (bf16 recommended on TPU; the MXU
    accumulates in f32 either way).  Softmax / LayerNorm / residual math stays f32.
    Pass a bf16 `x` to also halve activation HBM traffic when the model is bf16.
    """
    B, S, D = x.shape
    assert D % num_heads == 0, "d_token must be divisible by num_heads"
    d_k = D // num_heads
    d_ff = params["w1"].shape[0]
    # NOTE: keep D and d_ff multiples of 128 at production sizes for lane-dense
    # (unmasked) vector stores; the tiny test dims are functionally fine.

    if block_b is None:
        # >= 2 grid steps: shards across v7x's 2 TensorCores and lets the BlockSpec
        # pipeline overlap x DMA / output writeback with compute.
        block_b = B if B < 2 else _largest_divisor_leq(B, B // 2)
    assert B % block_b == 0, "B must be divisible by block_b"

    q_tile = _largest_divisor_leq(S, q_tile)        # bounds (Bb, Tq, S) score temps
    ff_chunk = _largest_divisor_leq(d_ff, ff_chunk)
    n_ffc = d_ff // ff_chunk

    md = matmul_dtype
    f32 = jnp.float32
    scale = 1.0 / math.sqrt(d_k)

    # ---- host-side layout prep ----
    # Linear weights transposed to (in, out); softmax scale folded into Wq / bq;
    # FFN weights pre-split into d_ff chunks so the kernel never slices weight lanes.
    wq_t = (params["wq"].T * scale).astype(md)                   # (D, D)
    bq_s = (params["bq"] * scale).astype(f32)                    # (1, D)
    wk_t = params["wk"].T.astype(md)
    wv_t = params["wv"].T.astype(md)
    wo_t = params["wo"].T.astype(md)                             # (D, D)
    w1_c = params["w1"].T.reshape(D, n_ffc, ff_chunk).transpose(1, 0, 2).astype(md)
    b1_c = params["b1"].reshape(1, n_ffc, ff_chunk).transpose(1, 0, 2).astype(f32)
    w2_c = params["w2"].T.reshape(n_ffc, ff_chunk, D).astype(md)

    param_list = [
        wq_t, bq_s,
        wk_t, params["bk"].astype(f32),
        wv_t, params["bv"].astype(f32),
        wo_t, params["bo"].astype(f32),
        params["g1"].astype(f32), params["be1"].astype(f32),
        w1_c, b1_c, w2_c, params["b2"].astype(f32),
        params["g2"].astype(f32), params["be2"].astype(f32),
    ]

    in_specs = [pl.BlockSpec((block_b, S, D), lambda b: (b, 0, 0))]
    in_specs += [_const_spec(p.shape) for p in param_list]

    kernel = functools.partial(_encoder_layer_kernel, num_heads=num_heads,
                               matmul_dtype=md, q_tile=q_tile,
                               approx_recip=approx_softmax_recip)

    n_steps = B // block_b
    flops = (4 * 2 * B * S * D * D             # q / k / v / out projections
             + 2 * 2 * B * S * S * D           # scores + attn @ V (summed over heads)
             + 2 * 2 * B * S * D * d_ff)       # FFN
    transcendentals = B * num_heads * S * S + 4 * B * S
    bytes_accessed = (2 * int(x.size) * x.dtype.itemsize
                      + sum(int(p.size) * p.dtype.itemsize for p in param_list))

    if vmem_limit_bytes is None:
        vmem_limit_bytes = _default_vmem_limit_bytes()

    return pl.pallas_call(
        kernel,
        out_shape=jax.ShapeDtypeStruct((B, S, D), x.dtype),
        grid_spec=pltpu.PrefetchScalarGridSpec(
            num_scalar_prefetch=0,
            grid=(n_steps,),
            in_specs=in_specs,
            out_specs=pl.BlockSpec((block_b, S, D), lambda b: (b, 0, 0)),
            scratch_shapes=[pltpu.VMEM((block_b, S, D), md)],   # per-head ctx staging
        ),
        compiler_params=pltpu.CompilerParams(
            dimension_semantics=("parallel",),   # shards grid steps across TCs (v7x)
            vmem_limit_bytes=vmem_limit_bytes,
        ),
        cost_estimate=pl.CostEstimate(flops=flops,
                                      transcendentals=transcendentals,
                                      bytes_accessed=bytes_accessed),
    )(x, *param_list)


def _reference(x, p, num_heads):
    # pure-JAX reference of the PyTorch forward (dropout = identity)
    B, S, D = x.shape
    d_k = D // num_heads

    def lin(v, w, b):
        return v @ w.T + b

    q = lin(x, p["wq"], p["bq"]).reshape(B, S, num_heads, d_k).transpose(0, 2, 1, 3)
    k = lin(x, p["wk"], p["bk"]).reshape(B, S, num_heads, d_k).transpose(0, 2, 1, 3)
    v = lin(x, p["wv"], p["bv"]).reshape(B, S, num_heads, d_k).transpose(0, 2, 1, 3)
    scores = jnp.einsum("bhqd,bhkd->bhqk", q, k) / math.sqrt(d_k)
    attn = jax.nn.softmax(scores, axis=-1)
    o = jnp.einsum("bhqk,bhkd->bhqd", attn, v).transpose(0, 2, 1, 3).reshape(B, S, D)
    o = lin(o, p["wo"], p["bo"])

    def ln(val, g, b):
        mu = val.mean(-1, keepdims=True)
        var = ((val - mu) ** 2).mean(-1, keepdims=True)
        return (val - mu) / jnp.sqrt(var + 1e-5) * g + b

    h1 = ln(o + x, p["g1"], p["be1"])
    ff = lin(jnp.maximum(lin(h1, p["w1"], p["b1"]), 0.0), p["w2"], p["b2"])
    return ln(ff + h1, p["g2"], p["be2"])


if __name__ == "__main__":
    B, S, D = 2, 8, 32
    num_heads = 4
    d_ff = 64

    key = jax.random.PRNGKey(0)
    keys = jax.random.split(key, 16)

    def w(k, out_dim, in_dim):
        return (jax.random.normal(k, (out_dim, in_dim), jnp.float32)
                * (1.0 / math.sqrt(in_dim)))

    params = {
        # attention linears: W (out, in) (PyTorch layout), b stored as (1, out)
        "wq": w(keys[0], D, D), "bq": jax.random.normal(keys[1], (1, D)) * 0.01,
        "wk": w(keys[2], D, D), "bk": jax.random.normal(keys[3], (1, D)) * 0.01,
        "wv": w(keys[4], D, D), "bv": jax.random.normal(keys[5], (1, D)) * 0.01,
        "wo": w(keys[6], D, D), "bo": jax.random.normal(keys[7], (1, D)) * 0.01,
        # LayerNorm1 (PyTorch init: weight=1, bias=0)
        "g1": jnp.ones((1, D), jnp.float32), "be1": jnp.zeros((1, D), jnp.float32),
        # FeedForward
        "w1": w(keys[8], d_ff, D), "b1": jax.random.normal(keys[9], (1, d_ff)) * 0.01,
        "w2": w(keys[10], D, d_ff), "b2": jax.random.normal(keys[11], (1, D)) * 0.01,
        # LayerNorm2
        "g2": jnp.ones((1, D), jnp.float32), "be2": jnp.zeros((1, D), jnp.float32),
    }

    x = jax.random.normal(keys[12], (B, S, D), jnp.float32)

    ref = _reference(x, params, num_heads)

    # 1) f32 matmul operands + exact softmax division: tight correctness check.
    out_f32 = jax.block_until_ready(
        encoder_layer(x, params, num_heads, matmul_dtype=jnp.float32))
    assert out_f32.shape == (B, S, D)
    assert bool(jnp.isfinite(out_f32).all()), "non-finite values in f32 output"
    assert jnp.allclose(out_f32, ref, atol=2e-3, rtol=2e-3), \
        "f32 kernel mismatch vs JAX reference"

    # 2) default production path (bf16 MXU operands): loose sanity check.
    out_bf16 = jax.block_until_ready(encoder_layer(x, params, num_heads))
    assert bool(jnp.isfinite(out_bf16).all()), "non-finite values in bf16 output"
    rel_l2 = float(jnp.linalg.norm(out_bf16.astype(jnp.float32) - ref)
                   / jnp.linalg.norm(ref))
    assert rel_l2 < 8e-2, f"bf16 kernel rel-L2 error too large: {rel_l2}"

    print("KERNEL_OK")
</pallas_src>

<mosaic_0001>
module attributes {stable_mosaic.version = 11 : i64} {
  func.func @_encoder_layer_kernel(%arg0: i32, %arg1: memref<1x8x32xf32, #tpu.memory_space<vmem>>, %arg2: memref<32x32xf32, #tpu.memory_space<vmem>>, %arg3: memref<1x32xf32, #tpu.memory_space<vmem>>, %arg4: memref<32x32xf32, #tpu.memory_space<vmem>>, %arg5: memref<1x32xf32, #tpu.memory_space<vmem>>, %arg6: memref<32x32xf32, #tpu.memory_space<vmem>>, %arg7: memref<1x32xf32, #tpu.memory_space<vmem>>, %arg8: memref<32x32xf32, #tpu.memory_space<vmem>>, %arg9: memref<1x32xf32, #tpu.memory_space<vmem>>, %arg10: memref<1x32xf32, #tpu.memory_space<vmem>>, %arg11: memref<1x32xf32, #tpu.memory_space<vmem>>, %arg12: memref<1x32x64xf32, #tpu.memory_space<vmem>>, %arg13: memref<1x1x64xf32, #tpu.memory_space<vmem>>, %arg14: memref<1x64x32xf32, #tpu.memory_space<vmem>>, %arg15: memref<1x32xf32, #tpu.memory_space<vmem>>, %arg16: memref<1x32xf32, #tpu.memory_space<vmem>>, %arg17: memref<1x32xf32, #tpu.memory_space<vmem>>, %arg18: memref<1x8x32xf32, #tpu.memory_space<vmem>>, %arg19: memref<1x8x32xf32, #tpu.memory_space<vmem>>) attributes {dimension_semantics = [#tpu.dimension_semantics<parallel>], iteration_bounds = array<i64: 2>, scalar_prefetch = 0 : i64, scratch_operands = 1 : i64, tpu.core_type = #tpu.core_type<tc>, window_params = [{transform_indices = @transform_0, window_bounds = array<i64: 1, 8, 32>}, {pipeline_mode = #tpu.pipeline_mode<synchronous>, transform_indices = @transform_1, window_bounds = array<i64: 32, 32>}, {pipeline_mode = #tpu.pipeline_mode<synchronous>, transform_indices = @transform_2, window_bounds = array<i64: 1, 32>}, {pipeline_mode = #tpu.pipeline_mode<synchronous>, transform_indices = @transform_3, window_bounds = array<i64: 32, 32>}, {pipeline_mode = #tpu.pipeline_mode<synchronous>, transform_indices = @transform_4, window_bounds = array<i64: 1, 32>}, {pipeline_mode = #tpu.pipeline_mode<synchronous>, transform_indices = @transform_5, window_bounds = array<i64: 32, 32>}, {pipeline_mode = #tpu.pipeline_mode<synchronous>, transform_indices = @transform_6, window_bounds = array<i64: 1, 32>}, {pipeline_mode = #tpu.pipeline_mode<synchronous>, transform_indices = @transform_7, window_bounds = array<i64: 32, 32>}, {pipeline_mode = #tpu.pipeline_mode<synchronous>, transform_indices = @transform_8, window_bounds = array<i64: 1, 32>}, {pipeline_mode = #tpu.pipeline_mode<synchronous>, transform_indices = @transform_9, window_bounds = array<i64: 1, 32>}, {pipeline_mode = #tpu.pipeline_mode<synchronous>, transform_indices = @transform_10, window_bounds = array<i64: 1, 32>}, {pipeline_mode = #tpu.pipeline_mode<synchronous>, transform_indices = @transform_11, window_bounds = array<i64: 1, 32, 64>}, {pipeline_mode = #tpu.pipeline_mode<synchronous>, transform_indices = @transform_12, window_bounds = array<i64: 1, 1, 64>}, {pipeline_mode = #tpu.pipeline_mode<synchronous>, transform_indices = @transform_13, window_bounds = array<i64: 1, 64, 32>}, {pipeline_mode = #tpu.pipeline_mode<synchronous>, transform_indices = @transform_14, window_bounds = array<i64: 1, 32>}, {pipeline_mode = #tpu.pipeline_mode<synchronous>, transform_indices = @transform_15, window_bounds = array<i64: 1, 32>}, {pipeline_mode = #tpu.pipeline_mode<synchronous>, transform_indices = @transform_16, window_bounds = array<i64: 1, 32>}, {transform_indices = @transform_17, window_bounds = array<i64: 1, 8, 32>}]} {
    %c0 = arith.constant 0 : index
    %c0_0 = arith.constant 0 : index
    %0 = vector.load %arg3[%c0, %c0_0] : memref<1x32xf32, #tpu.memory_space<vmem>>, vector<1x32xf32>
    %c0_1 = arith.constant 0 : index
    %c0_2 = arith.constant 0 : index
    %1 = vector.load %arg5[%c0_1, %c0_2] : memref<1x32xf32, #tpu.memory_space<vmem>>, vector<1x32xf32>
    %c0_3 = arith.constant 0 : index
    %c0_4 = arith.constant 0 : index
    %2 = vector.load %arg7[%c0_3, %c0_4] : memref<1x32xf32, #tpu.memory_space<vmem>>, vector<1x32xf32>
    %c0_5 = arith.constant 0 : index
    %c0_6 = arith.constant 0 : index
    %3 = vector.load %arg9[%c0_5, %c0_6] : memref<1x32xf32, #tpu.memory_space<vmem>>, vector<1x32xf32>
    %c0_7 = arith.constant 0 : index
    %c0_8 = arith.constant 0 : index
    %4 = vector.load %arg15[%c0_7, %c0_8] : memref<1x32xf32, #tpu.memory_space<vmem>>, vector<1x32xf32>
    %c0_9 = arith.constant 0 : index
    %c0_10 = arith.constant 0 : index
    %5 = vector.load %arg10[%c0_9, %c0_10] : memref<1x32xf32, #tpu.memory_space<vmem>>, vector<1x32xf32>
    %c0_11 = arith.constant 0 : index
    %c0_12 = arith.constant 0 : index
    %6 = vector.load %arg11[%c0_11, %c0_12] : memref<1x32xf32, #tpu.memory_space<vmem>>, vector<1x32xf32>
    %c0_13 = arith.constant 0 : index
    %c0_14 = arith.constant 0 : index
    %7 = vector.load %arg16[%c0_13, %c0_14] : memref<1x32xf32, #tpu.memory_space<vmem>>, vector<1x32xf32>
    %c0_15 = arith.constant 0 : index
    %c0_16 = arith.constant 0 : index
    %8 = vector.load %arg17[%c0_15, %c0_16] : memref<1x32xf32, #tpu.memory_space<vmem>>, vector<1x32xf32>
    %c0_17 = arith.constant 0 : index
    %c0_18 = arith.constant 0 : index
    %c0_19 = arith.constant 0 : index
    %9 = vector.load %arg13[%c0_17, %c0_18, %c0_19] : memref<1x1x64xf32, #tpu.memory_space<vmem>>, vector<1x1x64xf32>
    %c0_20 = arith.constant 0 : index
    %c0_21 = arith.constant 0 : index
    %c0_22 = arith.constant 0 : index
    %10 = vector.load %arg1[%c0_20, %c0_21, %c0_22] : memref<1x8x32xf32, #tpu.memory_space<vmem>>, vector<1x8x32xf32>
    %11 = vector.shape_cast %10 : vector<1x8x32xf32> to vector<8x32xf32>
    %c0_23 = arith.constant 0 : index
    %c0_24 = arith.constant 0 : index
    %12 = vector.load %arg2[%c0_23, %c0_24] : memref<32x32xf32, #tpu.memory_space<vmem>>, vector<32x32xf32>
    %cst = arith.constant dense<0.000000e+00> : vector<8x32xf32>
    %13 = tpu.matmul %11, %12, %cst {dimension_numbers = #tpu.dot_dimension_numbers<[1], [0], [0], [1], [0, 0, 1, 1], [], []>} : vector<8x32xf32>, vector<32x32xf32>, vector<8x32xf32> -> vector<8x32xf32>
    %14 = vector.broadcast %0 : vector<1x32xf32> to vector<8x32xf32>
    %15 = arith.addf %13, %14 : vector<8x32xf32>
    %16 = vector.shape_cast %15 : vector<8x32xf32> to vector<1x8x32xf32>
    %c0_25 = arith.constant 0 : index
    %c0_26 = arith.constant 0 : index
    %17 = vector.load %arg4[%c0_25, %c0_26] : memref<32x32xf32, #tpu.memory_space<vmem>>, vector<32x32xf32>
    %cst_27 = arith.constant dense<0.000000e+00> : vector<8x32xf32>
    %18 = tpu.matmul %11, %17, %cst_27 {dimension_numbers = #tpu.dot_dimension_numbers<[1], [0], [0], [1], [0, 0, 1, 1], [], []>} : vector<8x32xf32>, vector<32x32xf32>, vector<8x32xf32> -> vector<8x32xf32>
    %19 = vector.broadcast %1 : vector<1x32xf32> to vector<8x32xf32>
    %20 = arith.addf %18, %19 : vector<8x32xf32>
    %21 = vector.shape_cast %20 : vector<8x32xf32> to vector<1x8x32xf32>
    %c0_28 = arith.constant 0 : index
    %c0_29 = arith.constant 0 : index
    %22 = vector.load %arg6[%c0_28, %c0_29] : memref<32x32xf32, #tpu.memory_space<vmem>>, vector<32x32xf32>
    %cst_30 = arith.constant dense<0.000000e+00> : vector<8x32xf32>
    %23 = tpu.matmul %11, %22, %cst_30 {dimension_numbers = #tpu.dot_dimension_numbers<[1], [0], [0], [1], [0, 0, 1, 1], [], []>} : vector<8x32xf32>, vector<32x32xf32>, vector<8x32xf32> -> vector<8x32xf32>
    %24 = vector.broadcast %2 : vector<1x32xf32> to vector<8x32xf32>
    %25 = arith.addf %23, %24 : vector<8x32xf32>
    %26 = vector.shape_cast %25 : vector<8x32xf32> to vector<1x8x32xf32>
    %27 = vector.extract_strided_slice %21 {offsets = [0, 0, 0], sizes = [1, 8, 8], strides = [1, 1, 1]} : vector<1x8x32xf32> to vector<1x8x8xf32>
    %28 = vector.extract_strided_slice %26 {offsets = [0, 0, 0], sizes = [1, 8, 8], strides = [1, 1, 1]} : vector<1x8x32xf32> to vector<1x8x8xf32>
    %29 = vector.extract_strided_slice %16 {offsets = [0, 0, 0], sizes = [1, 8, 8], strides = [1, 1, 1]} : vector<1x8x32xf32> to vector<1x8x8xf32>
    "tpu.trace_start"() <{level = 10 : i32, message = "bqd,bkd->bqk"}> : () -> ()
    %cst_31 = arith.constant dense<0.000000e+00> : vector<1x8x8xf32>
    %30 = tpu.matmul %29, %27, %cst_31 {dimension_numbers = #tpu.dot_dimension_numbers<[2], [2], [1], [1], [0, 0, 0, 1, 1, 1], [0], [0]>} : vector<1x8x8xf32>, vector<1x8x8xf32>, vector<1x8x8xf32> -> vector<1x8x8xf32>
    "tpu.trace_stop"() : () -> ()
    %cst_32 = arith.constant dense<0xFF800000> : vector<1x8xf32>
    %31 = vector.multi_reduction <maximumf>, %30, %cst_32 [2] : vector<1x8x8xf32> to vector<1x8xf32>
    %32 = vector.shape_cast %31 : vector<1x8xf32> to vector<1x8x1xf32>
    %33 = vector.broadcast %32 : vector<1x8x1xf32> to vector<1x8x8xf32>
    %34 = arith.subf %30, %33 : vector<1x8x8xf32>
    %35 = math.exp %34 : vector<1x8x8xf32>
    %cst_33 = arith.constant dense<0.000000e+00> : vector<1x8xf32>
    %36 = vector.multi_reduction <add>, %35, %cst_33 [2] : vector<1x8x8xf32> to vector<1x8xf32>
    %37 = vector.shape_cast %36 : vector<1x8xf32> to vector<1x8x1xf32>
    %38 = vector.broadcast %37 : vector<1x8x1xf32> to vector<1x8x8xf32>
    %39 = arith.divf %35, %38 : vector<1x8x8xf32>
    "tpu.trace_start"() <{level = 10 : i32, message = "bqk,bkd->bqd"}> : () -> ()
    %cst_34 = arith.constant dense<0.000000e+00> : vector<1x8x8xf32>
    %40 = tpu.matmul %39, %28, %cst_34 {dimension_numbers = #tpu.dot_dimension_numbers<[2], [1], [1], [2], [0, 0, 0, 1, 1, 2], [0], [0]>} : vector<1x8x8xf32>, vector<1x8x8xf32>, vector<1x8x8xf32> -> vector<1x8x8xf32>
    "tpu.trace_stop"() : () -> ()
    %c0_35 = arith.constant 0 : index
    %c0_36 = arith.constant 0 : index
    %c0_37 = arith.constant 0 : index
    %41 = vector.load %arg19[%c0_35, %c0_36, %c0_37] : memref<1x8x32xf32, #tpu.memory_space<vmem>>, vector<1x8x8xf32>
    tpu.vector_store %arg19[%c0_35, %c0_36, %c0_37], %40 {strides = array<i32>} : memref<1x8x32xf32, #tpu.memory_space<vmem>>, vector<1x8x8xf32>,
    %42 = vector.extract_strided_slice %21 {offsets = [0, 0, 8], sizes = [1, 8, 8], strides = [1, 1, 1]} : vector<1x8x32xf32> to vector<1x8x8xf32>
    %43 = vector.extract_strided_slice %26 {offsets = [0, 0, 8], sizes = [1, 8, 8], strides = [1, 1, 1]} : vector<1x8x32xf32> to vector<1x8x8xf32>
    %44 = vector.extract_strided_slice %16 {offsets = [0, 0, 8], sizes = [1, 8, 8], strides = [1, 1, 1]} : vector<1x8x32xf32> to vector<1x8x8xf32>
    "tpu.trace_start"() <{level = 10 : i32, message = "bqd,bkd->bqk"}> : () -> ()
    %cst_38 = arith.constant dense<0.000000e+00> : vector<1x8x8xf32>
    %45 = tpu.matmul %44, %42, %cst_38 {dimension_numbers = #tpu.dot_dimension_numbers<[2], [2], [1], [1], [0, 0, 0, 1, 1, 1], [0], [0]>} : vector<1x8x8xf32>, vector<1x8x8xf32>, vector<1x8x8xf32> -> vector<1x8x8xf32>
    "tpu.trace_stop"() : () -> ()
    %cst_39 = arith.constant dense<0xFF800000> : vector<1x8xf32>
    %46 = vector.multi_reduction <maximumf>, %45, %cst_39 [2] : vector<1x8x8xf32> to vector<1x8xf32>
    %47 = vector.shape_cast %46 : vector<1x8xf32> to vector<1x8x1xf32>
    %48 = vector.broadcast %47 : vector<1x8x1xf32> to vector<1x8x8xf32>
    %49 = arith.subf %45, %48 : vector<1x8x8xf32>
    %50 = math.exp %49 : vector<1x8x8xf32>
    %cst_40 = arith.constant dense<0.000000e+00> : vector<1x8xf32>
    %51 = vector.multi_reduction <add>, %50, %cst_40 [2] : vector<1x8x8xf32> to vector<1x8xf32>
    %52 = vector.shape_cast %51 : vector<1x8xf32> to vector<1x8x1xf32>
    %53 = vector.broadcast %52 : vector<1x8x1xf32> to vector<1x8x8xf32>
    %54 = arith.divf %50, %53 : vector<1x8x8xf32>
    "tpu.trace_start"() <{level = 10 : i32, message = "bqk,bkd->bqd"}> : () -> ()
    %cst_41 = arith.constant dense<0.000000e+00> : vector<1x8x8xf32>
    %55 = tpu.matmul %54, %43, %cst_41 {dimension_numbers = #tpu.dot_dimension_numbers<[2], [1], [1], [2], [0, 0, 0, 1, 1, 2], [0], [0]>} : vector<1x8x8xf32>, vector<1x8x8xf32>, vector<1x8x8xf32> -> vector<1x8x8xf32>
    "tpu.trace_stop"() : () -> ()
    %c0_42 = arith.constant 0 : index
    %c0_43 = arith.constant 0 : index
    %c8 = arith.constant 8 : index
    %56 = vector.load %arg19[%c0_42, %c0_43, %c8] : memref<1x8x32xf32, #tpu.memory_space<vmem>>, vector<1x8x8xf32>
    tpu.vector_store %arg19[%c0_42, %c0_43, %c8], %55 {strides = array<i32>} : memref<1x8x32xf32, #tpu.memory_space<vmem>>, vector<1x8x8xf32>,
    %57 = vector.extract_strided_slice %21 {offsets = [0, 0, 16], sizes = [1, 8, 8], strides = [1, 1, 1]} : vector<1x8x32xf32> to vector<1x8x8xf32>
    %58 = vector.extract_strided_slice %26 {offsets = [0, 0, 16], sizes = [1, 8, 8], strides = [1, 1, 1]} : vector<1x8x32xf32> to vector<1x8x8xf32>
    %59 = vector.extract_strided_slice %16 {offsets = [0, 0, 16], sizes = [1, 8, 8], strides = [1, 1, 1]} : vector<1x8x32xf32> to vector<1x8x8xf32>
    "tpu.trace_start"() <{level = 10 : i32, message = "bqd,bkd->bqk"}> : () -> ()
    %cst_44 = arith.constant dense<0.000000e+00> : vector<1x8x8xf32>
    %60 = tpu.matmul %59, %57, %cst_44 {dimension_numbers = #tpu.dot_dimension_numbers<[2], [2], [1], [1], [0, 0, 0, 1, 1, 1], [0], [0]>} : vector<1x8x8xf32>, vector<1x8x8xf32>, vector<1x8x8xf32> -> vector<1x8x8xf32>
    "tpu.trace_stop"() : () -> ()
    %cst_45 = arith.constant dense<0xFF800000> : vector<1x8xf32>
    %61 = vector.multi_reduction <maximumf>, %60, %cst_45 [2] : vector<1x8x8xf32> to vector<1x8xf32>
    %62 = vector.shape_cast %61 : vector<1x8xf32> to vector<1x8x1xf32>
    %63 = vector.broadcast %62 : vector<1x8x1xf32> to vector<1x8x8xf32>
    %64 = arith.subf %60, %63 : vector<1x8x8xf32>
    %65 = math.exp %64 : vector<1x8x8xf32>
    %cst_46 = arith.constant dense<0.000000e+00> : vector<1x8xf32>
    %66 = vector.multi_reduction <add>, %65, %cst_46 [2] : vector<1x8x8xf32> to vector<1x8xf32>
    %67 = vector.shape_cast %66 : vector<1x8xf32> to vector<1x8x1xf32>
    %68 = vector.broadcast %67 : vector<1x8x1xf32> to vector<1x8x8xf32>
    %69 = arith.divf %65, %68 : vector<1x8x8xf32>
    "tpu.trace_start"() <{level = 10 : i32, message = "bqk,bkd->bqd"}> : () -> ()
    %cst_47 = arith.constant dense<0.000000e+00> : vector<1x8x8xf32>
    %70 = tpu.matmul %69, %58, %cst_47 {dimension_numbers = #tpu.dot_dimension_numbers<[2], [1], [1], [2], [0, 0, 0, 1, 1, 2], [0], [0]>} : vector<1x8x8xf32>, vector<1x8x8xf32>, vector<1x8x8xf32> -> vector<1x8x8xf32>
    "tpu.trace_stop"() : () -> ()
    %c0_48 = arith.constant 0 : index
    %c0_49 = arith.constant 0 : index
    %c16 = arith.constant 16 : index
    %71 = vector.load %arg19[%c0_48, %c0_49, %c16] : memref<1x8x32xf32, #tpu.memory_space<vmem>>, vector<1x8x8xf32>
    tpu.vector_store %arg19[%c0_48, %c0_49, %c16], %70 {strides = array<i32>} : memref<1x8x32xf32, #tpu.memory_space<vmem>>, vector<1x8x8xf32>,
    %72 = vector.extract_strided_slice %21 {offsets = [0, 0, 24], sizes = [1, 8, 8], strides = [1, 1, 1]} : vector<1x8x32xf32> to vector<1x8x8xf32>
    %73 = vector.extract_strided_slice %26 {offsets = [0, 0, 24], sizes = [1, 8, 8], strides = [1, 1, 1]} : vector<1x8x32xf32> to vector<1x8x8xf32>
    %74 = vector.extract_strided_slice %16 {offsets = [0, 0, 24], sizes = [1, 8, 8], strides = [1, 1, 1]} : vector<1x8x32xf32> to vector<1x8x8xf32>
    "tpu.trace_start"() <{level = 10 : i32, message = "bqd,bkd->bqk"}> : () -> ()
    %cst_50 = arith.constant dense<0.000000e+00> : vector<1x8x8xf32>
    %75 = tpu.matmul %74, %72, %cst_50 {dimension_numbers = #tpu.dot_dimension_numbers<[2], [2], [1], [1], [0, 0, 0, 1, 1, 1], [0], [0]>} : vector<1x8x8xf32>, vector<1x8x8xf32>, vector<1x8x8xf32> -> vector<1x8x8xf32>
    "tpu.trace_stop"() : () -> ()
    %cst_51 = arith.constant dense<0xFF800000> : vector<1x8xf32>
    %76 = vector.multi_reduction <maximumf>, %75, %cst_51 [2] : vector<1x8x8xf32> to vector<1x8xf32>
    %77 = vector.shape_cast %76 : vector<1x8xf32> to vector<1x8x1xf32>
    %78 = vector.broadcast %77 : vector<1x8x1xf32> to vector<1x8x8xf32>
    %79 = arith.subf %75, %78 : vector<1x8x8xf32>
    %80 = math.exp %79 : vector<1x8x8xf32>
    %cst_52 = arith.constant dense<0.000000e+00> : vector<1x8xf32>
    %81 = vector.multi_reduction <add>, %80, %cst_52 [2] : vector<1x8x8xf32> to vector<1x8xf32>
    %82 = vector.shape_cast %81 : vector<1x8xf32> to vector<1x8x1xf32>
    %83 = vector.broadcast %82 : vector<1x8x1xf32> to vector<1x8x8xf32>
    %84 = arith.divf %80, %83 : vector<1x8x8xf32>
    "tpu.trace_start"() <{level = 10 : i32, message = "bqk,bkd->bqd"}> : () -> ()
    %cst_53 = arith.constant dense<0.000000e+00> : vector<1x8x8xf32>
    %85 = tpu.matmul %84, %73, %cst_53 {dimension_numbers = #tpu.dot_dimension_numbers<[2], [1], [1], [2], [0, 0, 0, 1, 1, 2], [0], [0]>} : vector<1x8x8xf32>, vector<1x8x8xf32>, vector<1x8x8xf32> -> vector<1x8x8xf32>
    "tpu.trace_stop"() : () -> ()
    %c0_54 = arith.constant 0 : index
    %c0_55 = arith.constant 0 : index
    %c24 = arith.constant 24 : index
    %86 = vector.load %arg19[%c0_54, %c0_55, %c24] : memref<1x8x32xf32, #tpu.memory_space<vmem>>, vector<1x8x8xf32>
    tpu.vector_store %arg19[%c0_54, %c0_55, %c24], %85 {strides = array<i32>} : memref<1x8x32xf32, #tpu.memory_space<vmem>>, vector<1x8x8xf32>,
    %c0_56 = arith.constant 0 : index
    %c0_57 = arith.constant 0 : index
    %c0_58 = arith.constant 0 : index
    %87 = vector.load %arg19[%c0_56, %c0_57, %c0_58] : memref<1x8x32xf32, #tpu.memory_space<vmem>>, vector<1x8x32xf32>
    %88 = vector.shape_cast %87 : vector<1x8x32xf32> to vector<8x32xf32>
    %c0_59 = arith.constant 0 : index
    %c0_60 = arith.constant 0 : index
    %89 = vector.load %arg8[%c0_59, %c0_60] : memref<32x32xf32, #tpu.memory_space<vmem>>, vector<32x32xf32>
    %cst_61 = arith.constant dense<0.000000e+00> : vector<8x32xf32>
    %90 = tpu.matmul %88, %89, %cst_61 {dimension_numbers = #tpu.dot_dimension_numbers<[1], [0], [0], [1], [0, 0, 1, 1], [], []>} : vector<8x32xf32>, vector<32x32xf32>, vector<8x32xf32> -> vector<8x32xf32>
    %91 = vector.broadcast %3 : vector<1x32xf32> to vector<8x32xf32>
    %92 = arith.addf %90, %91 : vector<8x32xf32>
    %93 = arith.addf %92, %11 : vector<8x32xf32>
    %cst_62 = arith.constant dense<0.000000e+00> : vector<8xf32>
    %94 = vector.multi_reduction <add>, %93, %cst_62 [1] : vector<8x32xf32> to vector<8xf32>
    %95 = vector.shape_cast %94 : vector<8xf32> to vector<8x1xf32>
    %cst_63 = arith.constant 3.200000e+01 : f32
    %96 = vector.broadcast %cst_63 : f32 to vector<8x1xf32>
    %97 = arith.divf %95, %96 : vector<8x1xf32>
    %98 = vector.broadcast %97 : vector<8x1xf32> to vector<8x32xf32>
    %99 = arith.subf %93, %98 : vector<8x32xf32>
    %100 = arith.mulf %99, %99 : vector<8x32xf32>
    %cst_64 = arith.constant dense<0.000000e+00> : vector<8xf32>
    %101 = vector.multi_reduction <add>, %100, %cst_64 [1] : vector<8x32xf32> to vector<8xf32>
    %102 = vector.shape_cast %101 : vector<8xf32> to vector<8x1xf32>
    %cst_65 = arith.constant 3.200000e+01 : f32
    %103 = vector.broadcast %cst_65 : f32 to vector<8x1xf32>
    %104 = arith.divf %102, %103 : vector<8x1xf32>
    %105 = vector.broadcast %97 : vector<8x1xf32> to vector<8x32xf32>
    %106 = arith.subf %93, %105 : vector<8x32xf32>
    %cst_66 = arith.constant 9.99999974E-6 : f32
    %107 = vector.broadcast %cst_66 : f32 to vector<8x1xf32>
    %108 = arith.addf %104, %107 : vector<8x1xf32>
    %109 = math.rsqrt %108 : vector<8x1xf32>
    %110 = vector.broadcast %109 : vector<8x1xf32> to vector<8x32xf32>
    %111 = arith.mulf %106, %110 : vector<8x32xf32>
    %112 = vector.broadcast %5 : vector<1x32xf32> to vector<8x32xf32>
    %113 = arith.mulf %111, %112 : vector<8x32xf32>
    %114 = vector.broadcast %6 : vector<1x32xf32> to vector<8x32xf32>
    %115 = arith.addf %113, %114 : vector<8x32xf32>
    %cst_67 = arith.constant 0.000000e+00 : f32
    %116 = vector.broadcast %cst_67 : f32 to vector<8x32xf32>
    %c0_68 = arith.constant 0 : index
    %c0_69 = arith.constant 0 : index
    %c0_70 = arith.constant 0 : index
    %117 = vector.load %arg12[%c0_68, %c0_69, %c0_70] : memref<1x32x64xf32, #tpu.memory_space<vmem>>, vector<1x32x64xf32>
    %118 = vector.shape_cast %117 : vector<1x32x64xf32> to vector<32x64xf32>
    %cst_71 = arith.constant dense<0.000000e+00> : vector<8x64xf32>
    %119 = tpu.matmul %115, %118, %cst_71 {dimension_numbers = #tpu.dot_dimension_numbers<[1], [0], [0], [1], [0, 0, 1, 1], [], []>} : vector<8x32xf32>, vector<32x64xf32>, vector<8x64xf32> -> vector<8x64xf32>
    %120 = vector.shape_cast %9 : vector<1x1x64xf32> to vector<1x64xf32>
    %121 = vector.broadcast %120 : vector<1x64xf32> to vector<8x64xf32>
    %122 = arith.addf %119, %121 : vector<8x64xf32>
    %cst_72 = arith.constant 0.000000e+00 : f32
    %123 = vector.broadcast %cst_72 : f32 to vector<8x64xf32>
    %124 = arith.maximumf %122, %123 : vector<8x64xf32>
    %c0_73 = arith.constant 0 : index
    %c0_74 = arith.constant 0 : index
    %c0_75 = arith.constant 0 : index
    %125 = vector.load %arg14[%c0_73, %c0_74, %c0_75] : memref<1x64x32xf32, #tpu.memory_space<vmem>>, vector<1x64x32xf32>
    %126 = vector.shape_cast %125 : vector<1x64x32xf32> to vector<64x32xf32>
    %cst_76 = arith.constant dense<0.000000e+00> : vector<8x32xf32>
    %127 = tpu.matmul %124, %126, %cst_76 {dimension_numbers = #tpu.dot_dimension_numbers<[1], [0], [0], [1], [0, 0, 1, 1], [], []>} : vector<8x64xf32>, vector<64x32xf32>, vector<8x32xf32> -> vector<8x32xf32>
    %128 = arith.addf %116, %127 : vector<8x32xf32>
    %129 = vector.broadcast %4 : vector<1x32xf32> to vector<8x32xf32>
    %130 = arith.addf %128, %129 : vector<8x32xf32>
    %131 = arith.addf %130, %115 : vector<8x32xf32>
    %cst_77 = arith.constant dense<0.000000e+00> : vector<8xf32>
    %132 = vector.multi_reduction <add>, %131, %cst_77 [1] : vector<8x32xf32> to vector<8xf32>
    %133 = vector.shape_cast %132 : vector<8xf32> to vector<8x1xf32>
    %cst_78 = arith.constant 3.200000e+01 : f32
    %134 = vector.broadcast %cst_78 : f32 to vector<8x1xf32>
    %135 = arith.divf %133, %134 : vector<8x1xf32>
    %136 = vector.broadcast %135 : vector<8x1xf32> to vector<8x32xf32>
    %137 = arith.subf %131, %136 : vector<8x32xf32>
    %138 = arith.mulf %137, %137 : vector<8x32xf32>
    %cst_79 = arith.constant dense<0.000000e+00> : vector<8xf32>
    %139 = vector.multi_reduction <add>, %138, %cst_79 [1] : vector<8x32xf32> to vector<8xf32>
    %140 = vector.shape_cast %139 : vector<8xf32> to vector<8x1xf32>
    %cst_80 = arith.constant 3.200000e+01 : f32
    %141 = vector.broadcast %cst_80 : f32 to vector<8x1xf32>
    %142 = arith.divf %140, %141 : vector<8x1xf32>
    %143 = vector.broadcast %135 : vector<8x1xf32> to vector<8x32xf32>
    %144 = arith.subf %131, %143 : vector<8x32xf32>
    %cst_81 = arith.constant 9.99999974E-6 : f32
    %145 = vector.broadcast %cst_81 : f32 to vector<8x1xf32>
    %146 = arith.addf %142, %145 : vector<8x1xf32>
    %147 = math.rsqrt %146 : vector<8x1xf32>
    %148 = vector.broadcast %147 : vector<8x1xf32> to vector<8x32xf32>
    %149 = arith.mulf %144, %148 : vector<8x32xf32>
    %150 = vector.broadcast %7 : vector<1x32xf32> to vector<8x32xf32>
    %151 = arith.mulf %149, %150 : vector<8x32xf32>
    %152 = vector.broadcast %8 : vector<1x32xf32> to vector<8x32xf32>
    %153 = arith.addf %151, %152 : vector<8x32xf32>
    %154 = vector.shape_cast %153 : vector<8x32xf32> to vector<1x8x32xf32>
    %c0_82 = arith.constant 0 : index
    %c0_83 = arith.constant 0 : index
    %c0_84 = arith.constant 0 : index
    %155 = vector.load %arg18[%c0_82, %c0_83, %c0_84] : memref<1x8x32xf32, #tpu.memory_space<vmem>>, vector<1x8x32xf32>
    tpu.vector_store %arg18[%c0_82, %c0_83, %c0_84], %154 {strides = array<i32>} : memref<1x8x32xf32, #tpu.memory_space<vmem>>, vector<1x8x32xf32>,
    return
  }
  func.func @transform_0(%arg0: i32) -> (i32, i32, i32) {
    %c0_i32 = arith.constant 0 : i32
    %c0_i32_0 = arith.constant 0 : i32
    %c0_i32_1 = arith.constant 0 : i32
    return %arg0, %c0_i32, %c0_i32_0 : i32, i32, i32
  }
  func.func @transform_1(%arg0: i32) -> (i32, i32) {
    %c0_i32 = arith.constant 0 : i32
    %c0_i32_0 = arith.constant 0 : i32
    %c0_i32_1 = arith.constant 0 : i32
    return %c0_i32, %c0_i32_0 : i32, i32
  }
  func.func @transform_2(%arg0: i32) -> (i32, i32) {
    %c0_i32 = arith.constant 0 : i32
    %c0_i32_0 = arith.constant 0 : i32
    %c0_i32_1 = arith.constant 0 : i32
    return %c0_i32, %c0_i32_0 : i32, i32
  }
  func.func @transform_3(%arg0: i32) -> (i32, i32) {
    %c0_i32 = arith.constant 0 : i32
    %c0_i32_0 = arith.constant 0 : i32
    %c0_i32_1 = arith.constant 0 : i32
    return %c0_i32, %c0_i32_0 : i32, i32
  }
  func.func @transform_4(%arg0: i32) -> (i32, i32) {
    %c0_i32 = arith.constant 0 : i32
    %c0_i32_0 = arith.constant 0 : i32
    %c0_i32_1 = arith.constant 0 : i32
    return %c0_i32, %c0_i32_0 : i32, i32
  }
  func.func @transform_5(%arg0: i32) -> (i32, i32) {
    %c0_i32 = arith.constant 0 : i32
    %c0_i32_0 = arith.constant 0 : i32
    %c0_i32_1 = arith.constant 0 : i32
    return %c0_i32, %c0_i32_0 : i32, i32
  }
  func.func @transform_6(%arg0: i32) -> (i32, i32) {
    %c0_i32 = arith.constant 0 : i32
    %c0_i32_0 = arith.constant 0 : i32
    %c0_i32_1 = arith.constant 0 : i32
    return %c0_i32, %c0_i32_0 : i32, i32
  }
  func.func @transform_7(%arg0: i32) -> (i32, i32) {
    %c0_i32 = arith.constant 0 : i32
    %c0_i32_0 = arith.constant 0 : i32
    %c0_i32_1 = arith.constant 0 : i32
    return %c0_i32, %c0_i32_0 : i32, i32
  }
  func.func @transform_8(%arg0: i32) -> (i32, i32) {
    %c0_i32 = arith.constant 0 : i32
    %c0_i32_0 = arith.constant 0 : i32
    %c0_i32_1 = arith.constant 0 : i32
    return %c0_i32, %c0_i32_0 : i32, i32
  }
  func.func @transform_9(%arg0: i32) -> (i32, i32) {
    %c0_i32 = arith.constant 0 : i32
    %c0_i32_0 = arith.constant 0 : i32
    %c0_i32_1 = arith.constant 0 : i32
    return %c0_i32, %c0_i32_0 : i32, i32
  }
  func.func @transform_10(%arg0: i32) -> (i32, i32) {
    %c0_i32 = arith.constant 0 : i32
    %c0_i32_0 = arith.constant 0 : i32
    %c0_i32_1 = arith.constant 0 : i32
    return %c0_i32, %c0_i32_0 : i32, i32
  }
  func.func @transform_11(%arg0: i32) -> (i32, i32, i32) {
    %c0_i32 = arith.constant 0 : i32
    %c0_i32_0 = arith.constant 0 : i32
    %c0_i32_1 = arith.constant 0 : i32
    %c0_i32_2 = arith.constant 0 : i32
    return %c0_i32, %c0_i32_0, %c0_i32_1 : i32, i32, i32
  }
  func.func @transform_12(%arg0: i32) -> (i32, i32, i32) {
    %c0_i32 = arith.constant 0 : i32
    %c0_i32_0 = arith.constant 0 : i32
    %c0_i32_1 = arith.constant 0 : i32
    %c0_i32_2 = arith.constant 0 : i32
    return %c0_i32, %c0_i32_0, %c0_i32_1 : i32, i32, i32
  }
  func.func @transform_13(%arg0: i32) -> (i32, i32, i32) {
    %c0_i32 = arith.constant 0 : i32
    %c0_i32_0 = arith.constant 0 : i32
    %c0_i32_1 = arith.constant 0 : i32
    %c0_i32_2 = arith.constant 0 : i32
    return %c0_i32, %c0_i32_0, %c0_i32_1 : i32, i32, i32
  }
  func.func @transform_14(%arg0: i32) -> (i32, i32) {
    %c0_i32 = arith.constant 0 : i32
    %c0_i32_0 = arith.constant 0 : i32
    %c0_i32_1 = arith.constant 0 : i32
    return %c0_i32, %c0_i32_0 : i32, i32
  }
  func.func @transform_15(%arg0: i32) -> (i32, i32) {
    %c0_i32 = arith.constant 0 : i32
    %c0_i32_0 = arith.constant 0 : i32
    %c0_i32_1 = arith.constant 0 : i32
    return %c0_i32, %c0_i32_0 : i32, i32
  }
  func.func @transform_16(%arg0: i32) -> (i32, i32) {
    %c0_i32 = arith.constant 0 : i32
    %c0_i32_0 = arith.constant 0 : i32
    %c0_i32_1 = arith.constant 0 : i32
    return %c0_i32, %c0_i32_0 : i32, i32
  }
  func.func @transform_17(%arg0: i32) -> (i32, i32, i32) {
    %c0_i32 = arith.constant 0 : i32
    %c0_i32_0 = arith.constant 0 : i32
    %c0_i32_1 = arith.constant 0 : i32
    return %arg0, %c0_i32, %c0_i32_0 : i32, i32, i32
  }
}

</mosaic_0001>

<llo_original>
// kernel: tpu_custom_call.1
$region0: #{tpu_custom_call.1}
  #allocation0 [shape = 'u32[]', space=smem, size = 0x4, offset = 0x4, fixed_abs, tag = 'smem constant byte address 0x4 - core index']
  #allocation1 [shape = 'u32[144,128]{1,0:T(1,128)}', space=vmem, size = 0x12000, scoped, tag = 'internal scratch']
  #allocation2 [shape = 'f32[1,8,32]{2,1,0:T(8,128)}', space=vmem, size = 0x1000, scoped, tag = 'scratch operand']
  %s0 = inlined_call_operand.hbm [shape: f32[2,8,32], index: 0, kind: input, shape index: {}]
  %s1 = inlined_call_operand.hbm [shape: f32[32,32], index: 1, kind: input, shape index: {}]
  %s2 = inlined_call_operand.hbm [shape: f32[1,32], index: 2, kind: input, shape index: {}]
  %s3 = inlined_call_operand.hbm [shape: f32[32,32], index: 3, kind: input, shape index: {}]
  %s4 = inlined_call_operand.hbm [shape: f32[1,32], index: 4, kind: input, shape index: {}]
  %s5 = inlined_call_operand.hbm [shape: f32[32,32], index: 5, kind: input, shape index: {}]
  %s6 = inlined_call_operand.hbm [shape: f32[1,32], index: 6, kind: input, shape index: {}]
  %s7 = inlined_call_operand.hbm [shape: f32[32,32], index: 7, kind: input, shape index: {}]
  %s8 = inlined_call_operand.hbm [shape: f32[1,32], index: 8, kind: input, shape index: {}]
  %s9 = inlined_call_operand.hbm [shape: f32[1,32], index: 9, kind: input, shape index: {}]
  %s10 = inlined_call_operand.hbm [shape: f32[1,32], index: 10, kind: input, shape index: {}]
  %s11 = inlined_call_operand.hbm [shape: f32[1,32,64], index: 11, kind: input, shape index: {}]
  %s12 = inlined_call_operand.hbm [shape: f32[1,1,64], index: 12, kind: input, shape index: {}]
  %s13 = inlined_call_operand.hbm [shape: f32[1,64,32], index: 13, kind: input, shape index: {}]
  %s14 = inlined_call_operand.hbm [shape: f32[1,32], index: 14, kind: input, shape index: {}]
  %s15 = inlined_call_operand.hbm [shape: f32[1,32], index: 15, kind: input, shape index: {}]
  %s16 = inlined_call_operand.hbm [shape: f32[1,32], index: 16, kind: input, shape index: {}]
  %s17 = inlined_call_operand.hbm [shape: f32[2,8,32], index: 17, kind: output, shape index: {}]
  %s18 = sld [smem:[#allocation0]]
  $region169: #{tpu_custom_call.1} parent=0
    _
  %s20 = ssub.s32 1, %s18
  %s21 = scalar_select 0, %s20, %s18
  $region1: #{tpu_custom_call.1} parent=0
    #allocation3 [shape = 'u8[8192]{0}', space=vmem, size = 0x2000, scoped, tag = 'input window, operand 0']
    #allocation4 [shape = 's32[2]{0}', space=sflag, size = 0x8, scoped, tag = 'scoped memory for tpu_custom_call.1']
    #allocation5 [shape = 's32[2]{0}', space=sflag, size = 0x8, scoped, tag = 'scoped memory for tpu_custom_call.1']
    #allocation6 [shape = 'u8[16384]{0}', space=vmem, size = 0x4000, scoped, tag = 'input window, operand 1, single buffered']
    #allocation7 [shape = 's32[1]{0}', space=sflag, size = 0x4, scoped, tag = 'scoped memory for tpu_custom_call.1']
    #allocation8 [shape = 'u8[512]{0}', space=vmem, size = 0x400, scoped, tag = 'input window, operand 2, single buffered']
    #allocation9 [shape = 'u8[16384]{0}', space=vmem, size = 0x4000, scoped, tag = 'input window, operand 3, single buffered']
    #allocation10 [shape = 's32[1]{0}', space=sflag, size = 0x4, scoped, tag = 'scoped memory for tpu_custom_call.1']
    #allocation11 [shape = 'u8[512]{0}', space=vmem, size = 0x400, scoped, tag = 'input window, operand 4, single buffered']
    #allocation12 [shape = 'u8[16384]{0}', space=vmem, size = 0x4000, scoped, tag = 'input window, operand 5, single buffered']
    #allocation13 [shape = 's32[1]{0}', space=sflag, size = 0x4, scoped, tag = 'scoped memory for tpu_custom_call.1']
    #allocation14 [shape = 'u8[512]{0}', space=vmem, size = 0x400, scoped, tag = 'input window, operand 6, single buffered']
    #allocation15 [shape = 'u8[16384]{0}', space=vmem, size = 0x4000, scoped, tag = 'input window, operand 7, single buffered']
    #allocation16 [shape = 's32[1]{0}', space=sflag, size = 0x4, scoped, tag = 'scoped memory for tpu_custom_call.1']
    #allocation17 [shape = 'u8[512]{0}', space=vmem, size = 0x400, scoped, tag = 'input window, operand 8, single buffered']
    #allocation18 [shape = 'u8[512]{0}', space=vmem, size = 0x400, scoped, tag = 'input window, operand 9, single buffered']
    #allocation19 [shape = 's32[1]{0}', space=sflag, size = 0x4, scoped, tag = 'scoped memory for tpu_custom_call.1']
    #allocation20 [shape = 'u8[512]{0}', space=vmem, size = 0x400, scoped, tag = 'input window, operand 10, single buffered']
    #allocation21 [shape = 'u8[16384]{0}', space=vmem, size = 0x4000, scoped, tag = 'input window, operand 11, single buffered']
    #allocation22 [shape = 's32[1]{0}', space=sflag, size = 0x4, scoped, tag = 'scoped memory for tpu_custom_call.1']
    #allocation23 [shape = 'u8[512]{0}', space=vmem, size = 0x400, scoped, tag = 'input window, operand 12, single buffered']
    #allocation24 [shape = 'u8[32768]{0}', space=vmem, size = 0x8000, scoped, tag = 'input window, operand 13, single buffered']
    #allocation25 [shape = 's32[1]{0}', space=sflag, size = 0x4, scoped, tag = 'scoped memory for tpu_custom_call.1']
    #allocation26 [shape = 'u8[512]{0}', space=vmem, size = 0x400, scoped, tag = 'input window, operand 14, single buffered']
    #allocation27 [shape = 'u8[512]{0}', space=vmem, size = 0x400, scoped, tag = 'input window, operand 15, single buffered']
    #allocation28 [shape = 's32[1]{0}', space=sflag, size = 0x4, scoped, tag = 'scoped memory for tpu_custom_call.1']
    #allocation29 [shape = 'u8[512]{0}', space=vmem, size = 0x400, scoped, tag = 'input window, operand 16, single buffered']
    #allocation30 [shape = 'u8[8192]{0}', space=vmem, size = 0x2000, scoped, tag = 'output window, operand 0']
    %22 = vsyncpa [#allocation4], 0
    %s23 = scalar_lea.sflag [#allocation4], 1
    %24 = vsyncpa %s23, 0
    %25 = vsyncpa [#allocation7], 0
    %26 = vsyncpa [#allocation10], 0
    %27 = vsyncpa [#allocation13], 0
    %28 = vsyncpa [#allocation16], 0
    %29 = vsyncpa [#allocation19], 0
    %30 = vsyncpa [#allocation22], 0
    %31 = vsyncpa [#allocation25], 0
    %32 = vsyncpa [#allocation28], 0
    %33 = vsyncpa [#allocation5], 0
    %s34 = scalar_lea.sflag [#allocation5], 1
    %35 = vsyncpa %s34, 0
    loop: start=0, step=1, limit=4
    $region2: #{tpu_custom_call.1} parent=1 // loop_pre_header
      _
    $region3: #{tpu_custom_call.1} parent=1 // loop_header
      %s37 = sphi 0, %s41
      %p38 = scmp.ge.s32.totalorder %s37, 4
      %s47 = sphi 0, %s49
      %s50 = sphi 0, %s47
      %s51 = sphi 0, %s50
      %s67 = sphi 0, %s51
      %s71 = sphi 0, %s71
      %s73 = sphi 0, %s71
      %s74 = sphi 0, %s73
      %s88 = sphi 0, %s74
      %s92 = sphi 0, %s92
      %s94 = sphi 0, %s92
      %s95 = sphi 0, %s94
      %s109 = sphi 0, %s95
      %s113 = sphi 0, %s113
      %s115 = sphi 0, %s113
      %s116 = sphi 0, %s115
      %s130 = sphi 0, %s116
      %s134 = sphi 0, %s134
      %s136 = sphi 0, %s134
      %s137 = sphi 0, %s136
      %s151 = sphi 0, %s137
      %s155 = sphi 0, %s155
      %s157 = sphi 0, %s155
      %s158 = sphi 0, %s157
      %s172 = sphi 0, %s158
      %s176 = sphi 0, %s176
      %s178 = sphi 0, %s176
      %s179 = sphi 0, %s178
      %s193 = sphi 0, %s179
      %s197 = sphi 0, %s197
      %s199 = sphi 0, %s197
      %s200 = sphi 0, %s199
      %s214 = sphi 0, %s200
      %s218 = sphi 0, %s218
      %s220 = sphi 0, %s218
      %s221 = sphi 0, %s220
      %s235 = sphi 0, %s221
      %s239 = sphi 0, %s239
      %s241 = sphi 0, %s239
      %s242 = sphi 0, %s241
      %s256 = sphi 0, %s242
      %s260 = sphi 0, %s260
      %s262 = sphi 0, %s260
      %s263 = sphi 0, %s262
      %s277 = sphi 0, %s263
      %s281 = sphi 0, %s281
      %s283 = sphi 0, %s281
      %s284 = sphi 0, %s283
      %s298 = sphi 0, %s284
      %s302 = sphi 0, %s302
      %s304 = sphi 0, %s302
      %s305 = sphi 0, %s304
      %s319 = sphi 0, %s305
      %s323 = sphi 0, %s323
      %s325 = sphi 0, %s323
      %s326 = sphi 0, %s325
      %s340 = sphi 0, %s326
      %s344 = sphi 0, %s344
      %s346 = sphi 0, %s344
      %s347 = sphi 0, %s346
      %s361 = sphi 0, %s347
      %s365 = sphi 0, %s365
      %s367 = sphi 0, %s365
      %s368 = sphi 0, %s367
      %s382 = sphi 0, %s368
      %s386 = sphi 0, %s386
      %s388 = sphi 0, %s386
      %s389 = sphi 0, %s388
      %s403 = sphi 0, %s389
      %s409 = sphi 0, %s411
      %s412 = sphi 0, %s409
      %s413 = sphi 0, %s412
      %s429 = sphi 0, %s413
    $region4: #{tpu_custom_call.1} parent=1 // loop_header_branch
      %40 = sbr.rel (%p38) target = $region8
    $region5: #{tpu_custom_call.1} parent=1 // loop_body
      %s42 = ssub.s32 %s37, 1
      %s43 = ssub.s32 %s37, 2
      %s44 = sadd.s32 %s37, 1
      %s45 = ssub.s32 %s37, %s44
      %p46 = scmp.eq.s32.totalorder %s45, 0
      %s48 = sadd.s32 %s47, 1
      %s49 = scalar_select %p46, %s47, %s48
      %p52 = pneg %p46
      %p53 = scmp.eq.s32.totalorder %s37, 1
      %p54 = por %p52, %p53
      %p55 = scmp.ne.s32.totalorder %s47, %s50
      %p56 = scmp.eq.s32.totalorder %s37, 0
      %p57 = por %p55, %p56
      %p58 = scmp.ne.s32.totalorder %s47, %s50
      %p59 = scmp.eq.s32.totalorder %s42, 1
      %p60 = por %p58, %p59
      %p61 = scmp.ne.s32.totalorder %s50, %s51
      %p62 = scmp.eq.s32.totalorder %s42, 0
      %p63 = por %p61, %p62
      %p64 = scmp.ne.s32.totalorder %s50, %s51
      %p65 = scmp.eq.s32.totalorder %s43, 1
      %p66 = por %p64, %p65
      %p68 = scmp.ne.s32.totalorder %s51, %s67
      %p69 = scmp.eq.s32.totalorder %s43, 0
      %p70 = por %p68, %p69
      %s72 = sadd.s32 %s71, 1
      %p75 = scmp.eq.s32.totalorder %s37, 1
      %p76 = scmp.ne.s32.totalorder %s71, %s73
      %p77 = scmp.eq.s32.totalorder %s37, 0
      %p78 = por %p76, %p77
      %p79 = scmp.ne.s32.totalorder %s71, %s73
      %p80 = scmp.eq.s32.totalorder %s42, 1
      %p81 = por %p79, %p80
      %p82 = scmp.ne.s32.totalorder %s73, %s74
      %p83 = scmp.eq.s32.totalorder %s42, 0
      %p84 = por %p82, %p83
      %p85 = scmp.ne.s32.totalorder %s73, %s74
      %p86 = scmp.eq.s32.totalorder %s43, 1
      %p87 = por %p85, %p86
      %p89 = scmp.ne.s32.totalorder %s74, %s88
      %p90 = scmp.eq.s32.totalorder %s43, 0
      %p91 = por %p89, %p90
      %s93 = sadd.s32 %s92, 1
      %p96 = scmp.eq.s32.totalorder %s37, 1
      %p97 = scmp.ne.s32.totalorder %s92, %s94
      %p98 = scmp.eq.s32.totalorder %s37, 0
      %p99 = por %p97, %p98
      %p100 = scmp.ne.s32.totalorder %s92, %s94
      %p101 = scmp.eq.s32.totalorder %s42, 1
      %p102 = por %p100, %p101
      %p103 = scmp.ne.s32.totalorder %s94, %s95
      %p104 = scmp.eq.s32.totalorder %s42, 0
      %p105 = por %p103, %p104
      %p106 = scmp.ne.s32.totalorder %s94, %s95
      %p107 = scmp.eq.s32.totalorder %s43, 1
      %p108 = por %p106, %p107
      %p110 = scmp.ne.s32.totalorder %s95, %s109
      %p111 = scmp.eq.s32.totalorder %s43, 0
      %p112 = por %p110, %p111
      %s114 = sadd.s32 %s113, 1
      %p117 = scmp.eq.s32.totalorder %s37, 1
      %p118 = scmp.ne.s32.totalorder %s113, %s115
      %p119 = scmp.eq.s32.totalorder %s37, 0
      %p120 = por %p118, %p119
      %p121 = scmp.ne.s32.totalorder %s113, %s115
      %p122 = scmp.eq.s32.totalorder %s42, 1
      %p123 = por %p121, %p122
      %p124 = scmp.ne.s32.totalorder %s115, %s116
      %p125 = scmp.eq.s32.totalorder %s42, 0
      %p126 = por %p124, %p125
      %p127 = scmp.ne.s32.totalorder %s115, %s116
      %p128 = scmp.eq.s32.totalorder %s43, 1
      %p129 = por %p127, %p128
      %p131 = scmp.ne.s32.totalorder %s116, %s130
      %p132 = scmp.eq.s32.totalorder %s43, 0
      %p133 = por %p131, %p132
      %s135 = sadd.s32 %s134, 1
      %p138 = scmp.eq.s32.totalorder %s37, 1
      %p139 = scmp.ne.s32.totalorder %s134, %s136
      %p140 = scmp.eq.s32.totalorder %s37, 0
      %p141 = por %p139, %p140
      %p142 = scmp.ne.s32.totalorder %s134, %s136
      %p143 = scmp.eq.s32.totalorder %s42, 1
      %p144 = por %p142, %p143
      %p145 = scmp.ne.s32.totalorder %s136, %s137
      %p146 = scmp.eq.s32.totalorder %s42, 0
      %p147 = por %p145, %p146
      %p148 = scmp.ne.s32.totalorder %s136, %s137
      %p149 = scmp.eq.s32.totalorder %s43, 1
      %p150 = por %p148, %p149
      %p152 = scmp.ne.s32.totalorder %s137, %s151
      %p153 = scmp.eq.s32.totalorder %s43, 0
      %p154 = por %p152, %p153
      %s156 = sadd.s32 %s155, 1
      %p159 = scmp.eq.s32.totalorder %s37, 1
      %p160 = scmp.ne.s32.totalorder %s155, %s157
      %p161 = scmp.eq.s32.totalorder %s37, 0
      %p162 = por %p160, %p161
      %p163 = scmp.ne.s32.totalorder %s155, %s157
      %p164 = scmp.eq.s32.totalorder %s42, 1
      %p165 = por %p163, %p164
      %p166 = scmp.ne.s32.totalorder %s157, %s158
      %p167 = scmp.eq.s32.totalorder %s42, 0
      %p168 = por %p166, %p167
      %p169 = scmp.ne.s32.totalorder %s157, %s158
      %p170 = scmp.eq.s32.totalorder %s43, 1
      %p171 = por %p169, %p170
      %p173 = scmp.ne.s32.totalorder %s158, %s172
      %p174 = scmp.eq.s32.totalorder %s43, 0
      %p175 = por %p173, %p174
      %s177 = sadd.s32 %s176, 1
      %p180 = scmp.eq.s32.totalorder %s37, 1
      %p181 = scmp.ne.s32.totalorder %s176, %s178
      %p182 = scmp.eq.s32.totalorder %s37, 0
      %p183 = por %p181, %p182
      %p184 = scmp.ne.s32.totalorder %s176, %s178
      %p185 = scmp.eq.s32.totalorder %s42, 1
      %p186 = por %p184, %p185
      %p187 = scmp.ne.s32.totalorder %s178, %s179
      %p188 = scmp.eq.s32.totalorder %s42, 0
      %p189 = por %p187, %p188
      %p190 = scmp.ne.s32.totalorder %s178, %s179
      %p191 = scmp.eq.s32.totalorder %s43, 1
      %p192 = por %p190, %p191
      %p194 = scmp.ne.s32.totalorder %s179, %s193
      %p195 = scmp.eq.s32.totalorder %s43, 0
      %p196 = por %p194, %p195
      %s198 = sadd.s32 %s197, 1
      %p201 = scmp.eq.s32.totalorder %s37, 1
      %p202 = scmp.ne.s32.totalorder %s197, %s199
      %p203 = scmp.eq.s32.totalorder %s37, 0
      %p204 = por %p202, %p203
      %p205 = scmp.ne.s32.totalorder %s197, %s199
      %p206 = scmp.eq.s32.totalorder %s42, 1
      %p207 = por %p205, %p206
      %p208 = scmp.ne.s32.totalorder %s199, %s200
      %p209 = scmp.eq.s32.totalorder %s42, 0
      %p210 = por %p208, %p209
      %p211 = scmp.ne.s32.totalorder %s199, %s200
      %p212 = scmp.eq.s32.totalorder %s43, 1
      %p213 = por %p211, %p212
      %p215 = scmp.ne.s32.totalorder %s200, %s214
      %p216 = scmp.eq.s32.totalorder %s43, 0
      %p217 = por %p215, %p216
      %s219 = sadd.s32 %s218, 1
      %p222 = scmp.eq.s32.totalorder %s37, 1
      %p223 = scmp.ne.s32.totalorder %s218, %s220
      %p224 = scmp.eq.s32.totalorder %s37, 0
      %p225 = por %p223, %p224
      %p226 = scmp.ne.s32.totalorder %s218, %s220
      %p227 = scmp.eq.s32.totalorder %s42, 1
      %p228 = por %p226, %p227
      %p229 = scmp.ne.s32.totalorder %s220, %s221
      %p230 = scmp.eq.s32.totalorder %s42, 0
      %p231 = por %p229, %p230
      %p232 = scmp.ne.s32.totalorder %s220, %s221
      %p233 = scmp.eq.s32.totalorder %s43, 1
      %p234 = por %p232, %p233
      %p236 = scmp.ne.s32.totalorder %s221, %s235
      %p237 = scmp.eq.s32.totalorder %s43, 0
      %p238 = por %p236, %p237
      %s240 = sadd.s32 %s239, 1
      %p243 = scmp.eq.s32.totalorder %s37, 1
      %p244 = scmp.ne.s32.totalorder %s239, %s241
      %p245 = scmp.eq.s32.totalorder %s37, 0
      %p246 = por %p244, %p245
      %p247 = scmp.ne.s32.totalorder %s239, %s241
      %p248 = scmp.eq.s32.totalorder %s42, 1
      %p249 = por %p247, %p248
      %p250 = scmp.ne.s32.totalorder %s241, %s242
      %p251 = scmp.eq.s32.totalorder %s42, 0
      %p252 = por %p250, %p251
      %p253 = scmp.ne.s32.totalorder %s241, %s242
      %p254 = scmp.eq.s32.totalorder %s43, 1
      %p255 = por %p253, %p254
      %p257 = scmp.ne.s32.totalorder %s242, %s256
      %p258 = scmp.eq.s32.totalorder %s43, 0
      %p259 = por %p257, %p258
      %s261 = sadd.s32 %s260, 1
      %p264 = scmp.eq.s32.totalorder %s37, 1
      %p265 = scmp.ne.s32.totalorder %s260, %s262
      %p266 = scmp.eq.s32.totalorder %s37, 0
      %p267 = por %p265, %p266
      %p268 = scmp.ne.s32.totalorder %s260, %s262
      %p269 = scmp.eq.s32.totalorder %s42, 1
      %p270 = por %p268, %p269
      %p271 = scmp.ne.s32.totalorder %s262, %s263
      %p272 = scmp.eq.s32.totalorder %s42, 0
      %p273 = por %p271, %p272
      %p274 = scmp.ne.s32.totalorder %s262, %s263
      %p275 = scmp.eq.s32.totalorder %s43, 1
      %p276 = por %p274, %p275
      %p278 = scmp.ne.s32.totalorder %s263, %s277
      %p279 = scmp.eq.s32.totalorder %s43, 0
      %p280 = por %p278, %p279
      %s282 = sadd.s32 %s281, 1
      %p285 = scmp.eq.s32.totalorder %s37, 1
      %p286 = scmp.ne.s32.totalorder %s281, %s283
      %p287 = scmp.eq.s32.totalorder %s37, 0
      %p288 = por %p286, %p287
      %p289 = scmp.ne.s32.totalorder %s281, %s283
      %p290 = scmp.eq.s32.totalorder %s42, 1
      %p291 = por %p289, %p290
      %p292 = scmp.ne.s32.totalorder %s283, %s284
      %p293 = scmp.eq.s32.totalorder %s42, 0
      %p294 = por %p292, %p293
      %p295 = scmp.ne.s32.totalorder %s283, %s284
      %p296 = scmp.eq.s32.totalorder %s43, 1
      %p297 = por %p295, %p296
      %p299 = scmp.ne.s32.totalorder %s284, %s298
      %p300 = scmp.eq.s32.totalorder %s43, 0
      %p301 = por %p299, %p300
      %s303 = sadd.s32 %s302, 1
      %p306 = scmp.eq.s32.totalorder %s37, 1
      %p307 = scmp.ne.s32.totalorder %s302, %s304
      %p308 = scmp.eq.s32.totalorder %s37, 0
      %p309 = por %p307, %p308
      %p310 = scmp.ne.s32.totalorder %s302, %s304
      %p311 = scmp.eq.s32.totalorder %s42, 1
      %p312 = por %p310, %p311
      %p313 = scmp.ne.s32.totalorder %s304, %s305
      %p314 = scmp.eq.s32.totalorder %s42, 0
      %p315 = por %p313, %p314
      %p316 = scmp.ne.s32.totalorder %s304, %s305
      %p317 = scmp.eq.s32.totalorder %s43, 1
      %p318 = por %p316, %p317
      %p320 = scmp.ne.s32.totalorder %s305, %s319
      %p321 = scmp.eq.s32.totalorder %s43, 0
      %p322 = por %p320, %p321
      %s324 = sadd.s32 %s323, 1
      %p327 = scmp.eq.s32.totalorder %s37, 1
      %p328 = scmp.ne.s32.totalorder %s323, %s325
      %p329 = scmp.eq.s32.totalorder %s37, 0
      %p330 = por %p328, %p329
      %p331 = scmp.ne.s32.totalorder %s323, %s325
      %p332 = scmp.eq.s32.totalorder %s42, 1
      %p333 = por %p331, %p332
      %p334 = scmp.ne.s32.totalorder %s325, %s326
      %p335 = scmp.eq.s32.totalorder %s42, 0
      %p336 = por %p334, %p335
      %p337 = scmp.ne.s32.totalorder %s325, %s326
      %p338 = scmp.eq.s32.totalorder %s43, 1
      %p339 = por %p337, %p338
      %p341 = scmp.ne.s32.totalorder %s326, %s340
      %p342 = scmp.eq.s32.totalorder %s43, 0
      %p343 = por %p341, %p342
      %s345 = sadd.s32 %s344, 1
      %p348 = scmp.eq.s32.totalorder %s37, 1
      %p349 = scmp.ne.s32.totalorder %s344, %s346
      %p350 = scmp.eq.s32.totalorder %s37, 0
      %p351 = por %p349, %p350
      %p352 = scmp.ne.s32.totalorder %s344, %s346
      %p353 = scmp.eq.s32.totalorder %s42, 1
      %p354 = por %p352, %p353
      %p355 = scmp.ne.s32.totalorder %s346, %s347
      %p356 = scmp.eq.s32.totalorder %s42, 0
      %p357 = por %p355, %p356
      %p358 = scmp.ne.s32.totalorder %s346, %s347
      %p359 = scmp.eq.s32.totalorder %s43, 1
      %p360 = por %p358, %p359
      %p362 = scmp.ne.s32.totalorder %s347, %s361
      %p363 = scmp.eq.s32.totalorder %s43, 0
      %p364 = por %p362, %p363
      %s366 = sadd.s32 %s365, 1
      %p369 = scmp.eq.s32.totalorder %s37, 1
      %p370 = scmp.ne.s32.totalorder %s365, %s367
      %p371 = scmp.eq.s32.totalorder %s37, 0
      %p372 = por %p370, %p371
      %p373 = scmp.ne.s32.totalorder %s365, %s367
      %p374 = scmp.eq.s32.totalorder %s42, 1
      %p375 = por %p373, %p374
      %p376 = scmp.ne.s32.totalorder %s367, %s368
      %p377 = scmp.eq.s32.totalorder %s42, 0
      %p378 = por %p376, %p377
      %p379 = scmp.ne.s32.totalorder %s367, %s368
      %p380 = scmp.eq.s32.totalorder %s43, 1
      %p381 = por %p379, %p380
      %p383 = scmp.ne.s32.totalorder %s368, %s382
      %p384 = scmp.eq.s32.totalorder %s43, 0
      %p385 = por %p383, %p384
      %s387 = sadd.s32 %s386, 1
      %p390 = scmp.eq.s32.totalorder %s37, 1
      %p391 = scmp.ne.s32.totalorder %s386, %s388
      %p392 = scmp.eq.s32.totalorder %s37, 0
      %p393 = por %p391, %p392
      %p394 = scmp.ne.s32.totalorder %s386, %s388
      %p395 = scmp.eq.s32.totalorder %s42, 1
      %p396 = por %p394, %p395
      %p397 = scmp.ne.s32.totalorder %s388, %s389
      %p398 = scmp.eq.s32.totalorder %s42, 0
      %p399 = por %p397, %p398
      %p400 = scmp.ne.s32.totalorder %s388, %s389
      %p401 = scmp.eq.s32.totalorder %s43, 1
      %p402 = por %p400, %p401
      %p404 = scmp.ne.s32.totalorder %s389, %s403
      %p405 = scmp.eq.s32.totalorder %s43, 0
      %p406 = por %p404, %p405
      %s407 = ssub.s32 %s37, %s44
      %p408 = scmp.eq.s32.totalorder %s407, 0
      %s410 = sadd.s32 %s409, 1
      %s411 = scalar_select %p408, %s409, %s410
      %p414 = pneg %p408
      %p415 = scmp.eq.s32.totalorder %s37, 1
      %p416 = por %p414, %p415
      %p417 = scmp.ne.s32.totalorder %s409, %s412
      %p418 = scmp.eq.s32.totalorder %s37, 0
      %p419 = por %p417, %p418
      %p420 = scmp.ne.s32.totalorder %s409, %s412
      %p421 = scmp.eq.s32.totalorder %s42, 1
      %p422 = por %p420, %p421
      %p423 = scmp.ne.s32.totalorder %s412, %s413
      %p424 = scmp.eq.s32.totalorder %s42, 0
      %p425 = por %p423, %p424
      %p426 = scmp.ne.s32.totalorder %s412, %s413
      %p427 = scmp.eq.s32.totalorder %s43, 1
      %p428 = por %p426, %p427
      %p430 = scmp.ne.s32.totalorder %s413, %s429
      %p431 = scmp.eq.s32.totalorder %s43, 0
      %p432 = por %p430, %p431
      %p433 = scmp.le.s32.totalorder 1, %s37
      %p434 = scmp.lt.s32.totalorder %s37, 3
      %p435 = pnand %p433, %p434
      %p436 = pneg %p435
      // Predicated region
      $region9: #{tpu_custom_call.1} parent=5 // pred_check
        _
      $region10: #{tpu_custom_call.1} parent=5 // pred_check_branch
        %438 = sbr.rel (%p435) target = $region12
      $region11: #{tpu_custom_call.1} parent=5 // pred_region
        %s439 = ssub.s32 %s37, 1
        // Predicated region
        $region13: #{tpu_custom_call.1} parent=11 // pred_check
          %p440 = pneg %p84
        $region14: #{tpu_custom_call.1} parent=11 // pred_check_branch
          %442 = sbr.rel (%p440) target = $region16
        $region15: #{tpu_custom_call.1} parent=11 // pred_region
          %s444 = ssub.s32 512, 512
          %445 = vsyncadd [#allocation7], %s444
          %s446 = sshll.u32 [#allocation6], 4
          %s447 = int_to_ptr.vmem [resolvable:$true] %s446
          %452 = dma.hbm_to_vmem [thread:$0]  %s1, 512, %s447, [#allocation7], 128, 128, 8
        $region16: #{tpu_custom_call.1} parent=11 // pred_fallthru
          _
        // Predicated region
        $region17: #{tpu_custom_call.1} parent=11 // pred_check
          %p453 = pneg %p105
        $region18: #{tpu_custom_call.1} parent=11 // pred_check_branch
          %455 = sbr.rel (%p453) target = $region20
        $region19: #{tpu_custom_call.1} parent=11 // pred_region
          %s457 = ssub.s32 16, 16
          %458 = vsyncadd [#allocation7], %s457
          %s460 = sshll.u32 [#allocation8], 4
          %s461 = int_to_ptr.vmem [resolvable:$true] %s460
          %463 = dma.hbm_to_vmem [thread:$0]  %s2, 16, %s461, [#allocation7]
        $region20: #{tpu_custom_call.1} parent=11 // pred_fallthru
          _
        // Predicated region
        $region21: #{tpu_custom_call.1} parent=11 // pred_check
          %p464 = pneg %p126
        $region22: #{tpu_custom_call.1} parent=11 // pred_check_branch
          %466 = sbr.rel (%p464) target = $region24
        $region23: #{tpu_custom_call.1} parent=11 // pred_region
          %s468 = ssub.s32 512, 512
          %469 = vsyncadd [#allocation10], %s468
          %s470 = sshll.u32 [#allocation9], 4
          %s471 = int_to_ptr.vmem [resolvable:$true] %s470
          %476 = dma.hbm_to_vmem [thread:$0]  %s3, 512, %s471, [#allocation10], 128, 128, 8
        $region24: #{tpu_custom_call.1} parent=11 // pred_fallthru
          _
        // Predicated region
        $region25: #{tpu_custom_call.1} parent=11 // pred_check
          %p477 = pneg %p147
        $region26: #{tpu_custom_call.1} parent=11 // pred_check_branch
          %479 = sbr.rel (%p477) target = $region28
        $region27: #{tpu_custom_call.1} parent=11 // pred_region
          %s481 = ssub.s32 16, 16
          %482 = vsyncadd [#allocation10], %s481
          %s484 = sshll.u32 [#allocation11], 4
          %s485 = int_to_ptr.vmem [resolvable:$true] %s484
          %487 = dma.hbm_to_vmem [thread:$0]  %s4, 16, %s485, [#allocation10]
        $region28: #{tpu_custom_call.1} parent=11 // pred_fallthru
          _
        // Predicated region
        $region29: #{tpu_custom_call.1} parent=11 // pred_check
          %p488 = pneg %p168
        $region30: #{tpu_custom_call.1} parent=11 // pred_check_branch
          %490 = sbr.rel (%p488) target = $region32
        $region31: #{tpu_custom_call.1} parent=11 // pred_region
          %s492 = ssub.s32 512, 512
          %493 = vsyncadd [#allocation13], %s492
          %s494 = sshll.u32 [#allocation12], 4
          %s495 = int_to_ptr.vmem [resolvable:$true] %s494
          %500 = dma.hbm_to_vmem [thread:$0]  %s5, 512, %s495, [#allocation13], 128, 128, 8
        $region32: #{tpu_custom_call.1} parent=11 // pred_fallthru
          _
        // Predicated region
        $region33: #{tpu_custom_call.1} parent=11 // pred_check
          %p501 = pneg %p189
        $region34: #{tpu_custom_call.1} parent=11 // pred_check_branch
          %503 = sbr.rel (%p501) target = $region36
        $region35: #{tpu_custom_call.1} parent=11 // pred_region
          %s505 = ssub.s32 16, 16
          %506 = vsyncadd [#allocation13], %s505
          %s508 = sshll.u32 [#allocation14], 4
          %s509 = int_to_ptr.vmem [resolvable:$true] %s508
          %511 = dma.hbm_to_vmem [thread:$0]  %s6, 16, %s509, [#allocation13]
        $region36: #{tpu_custom_call.1} parent=11 // pred_fallthru
          _
        // Predicated region
        $region37: #{tpu_custom_call.1} parent=11 // pred_check
          %p512 = pneg %p210
        $region38: #{tpu_custom_call.1} parent=11 // pred_check_branch
          %514 = sbr.rel (%p512) target = $region40
        $region39: #{tpu_custom_call.1} parent=11 // pred_region
          %s516 = ssub.s32 512, 512
          %517 = vsyncadd [#allocation16], %s516
          %s518 = sshll.u32 [#allocation15], 4
          %s519 = int_to_ptr.vmem [resolvable:$true] %s518
          %524 = dma.hbm_to_vmem [thread:$0]  %s7, 512, %s519, [#allocation16], 128, 128, 8
        $region40: #{tpu_custom_call.1} parent=11 // pred_fallthru
          _
        // Predicated region
        $region41: #{tpu_custom_call.1} parent=11 // pred_check
          %p525 = pneg %p231
        $region42: #{tpu_custom_call.1} parent=11 // pred_check_branch
          %527 = sbr.rel (%p525) target = $region44
        $region43: #{tpu_custom_call.1} parent=11 // pred_region
          %s529 = ssub.s32 16, 16
          %530 = vsyncadd [#allocation16], %s529
          %s532 = sshll.u32 [#allocation17], 4
          %s533 = int_to_ptr.vmem [resolvable:$true] %s532
          %535 = dma.hbm_to_vmem [thread:$0]  %s8, 16, %s533, [#allocation16]
        $region44: #{tpu_custom_call.1} parent=11 // pred_fallthru
          _
        // Predicated region
        $region45: #{tpu_custom_call.1} parent=11 // pred_check
          %p536 = pneg %p252
        $region46: #{tpu_custom_call.1} parent=11 // pred_check_branch
          %538 = sbr.rel (%p536) target = $region48
        $region47: #{tpu_custom_call.1} parent=11 // pred_region
          %s540 = ssub.s32 16, 16
          %541 = vsyncadd [#allocation19], %s540
          %s543 = sshll.u32 [#allocation18], 4
          %s544 = int_to_ptr.vmem [resolvable:$true] %s543
          %546 = dma.hbm_to_vmem [thread:$0]  %s9, 16, %s544, [#allocation19]
        $region48: #{tpu_custom_call.1} parent=11 // pred_fallthru
          _
        // Predicated region
        $region49: #{tpu_custom_call.1} parent=11 // pred_check
          %p547 = pneg %p273
        $region50: #{tpu_custom_call.1} parent=11 // pred_check_branch
          %549 = sbr.rel (%p547) target = $region52
        $region51: #{tpu_custom_call.1} parent=11 // pred_region
          %s551 = ssub.s32 16, 16
          %552 = vsyncadd [#allocation19], %s551
          %s554 = sshll.u32 [#allocation20], 4
          %s555 = int_to_ptr.vmem [resolvable:$true] %s554
          %557 = dma.hbm_to_vmem [thread:$0]  %s10, 16, %s555, [#allocation19]
        $region52: #{tpu_custom_call.1} parent=11 // pred_fallthru
          _
        // Predicated region
        $region53: #{tpu_custom_call.1} parent=11 // pred_check
          %p558 = pneg %p294
        $region54: #{tpu_custom_call.1} parent=11 // pred_check_branch
          %560 = sbr.rel (%p558) target = $region56
        $region55: #{tpu_custom_call.1} parent=11 // pred_region
          %s562 = ssub.s32 512, 512
          %563 = vsyncadd [#allocation22], %s562
          %s564 = sshll.u32 [#allocation21], 4
          %s565 = int_to_ptr.vmem [resolvable:$true] %s564
          %570 = dma.hbm_to_vmem [thread:$0]  %s11, 512, %s565, [#allocation22], 128, 128, 8
        $region56: #{tpu_custom_call.1} parent=11 // pred_fallthru
          _
        // Predicated region
        $region57: #{tpu_custom_call.1} parent=11 // pred_check
          %p571 = pneg %p315
        $region58: #{tpu_custom_call.1} parent=11 // pred_check_branch
          %573 = sbr.rel (%p571) target = $region60
        $region59: #{tpu_custom_call.1} parent=11 // pred_region
          %s575 = ssub.s32 16, 16
          %576 = vsyncadd [#allocation22], %s575
          %s578 = sshll.u32 [#allocation23], 4
          %s579 = int_to_ptr.vmem [resolvable:$true] %s578
          %581 = dma.hbm_to_vmem [thread:$0]  %s12, 16, %s579, [#allocation22]
        $region60: #{tpu_custom_call.1} parent=11 // pred_fallthru
          _
        // Predicated region
        $region61: #{tpu_custom_call.1} parent=11 // pred_check
          %p582 = pneg %p336
        $region62: #{tpu_custom_call.1} parent=11 // pred_check_branch
          %584 = sbr.rel (%p582) target = $region64
        $region63: #{tpu_custom_call.1} parent=11 // pred_region
          %s586 = ssub.s32 1024, 1024
          %587 = vsyncadd [#allocation25], %s586
          %s588 = sshll.u32 [#allocation24], 4
          %s589 = int_to_ptr.vmem [resolvable:$true] %s588
          %594 = dma.hbm_to_vmem [thread:$0]  %s13, 1024, %s589, [#allocation25], 128, 128, 8
        $region64: #{tpu_custom_call.1} parent=11 // pred_fallthru
          _
        // Predicated region
        $region65: #{tpu_custom_call.1} parent=11 // pred_check
          %p595 = pneg %p357
        $region66: #{tpu_custom_call.1} parent=11 // pred_check_branch
          %597 = sbr.rel (%p595) target = $region68
        $region67: #{tpu_custom_call.1} parent=11 // pred_region
          %s599 = ssub.s32 16, 16
          %600 = vsyncadd [#allocation25], %s599
          %s602 = sshll.u32 [#allocation26], 4
          %s603 = int_to_ptr.vmem [resolvable:$true] %s602
          %605 = dma.hbm_to_vmem [thread:$0]  %s14, 16, %s603, [#allocation25]
        $region68: #{tpu_custom_call.1} parent=11 // pred_fallthru
          _
        // Predicated region
        $region69: #{tpu_custom_call.1} parent=11 // pred_check
          %p606 = pneg %p378
        $region70: #{tpu_custom_call.1} parent=11 // pred_check_branch
          %608 = sbr.rel (%p606) target = $region72
        $region71: #{tpu_custom_call.1} parent=11 // pred_region
          %s610 = ssub.s32 16, 16
          %611 = vsyncadd [#allocation28], %s610
          %s613 = sshll.u32 [#allocation27], 4
          %s614 = int_to_ptr.vmem [resolvable:$true] %s613
          %616 = dma.hbm_to_vmem [thread:$0]  %s15, 16, %s614, [#allocation28]
        $region72: #{tpu_custom_call.1} parent=11 // pred_fallthru
          _
        // Predicated region
        $region73: #{tpu_custom_call.1} parent=11 // pred_check
          %p617 = pneg %p399
        $region74: #{tpu_custom_call.1} parent=11 // pred_check_branch
          %619 = sbr.rel (%p617) target = $region76
        $region75: #{tpu_custom_call.1} parent=11 // pred_region
          %s621 = ssub.s32 16, 16
          %622 = vsyncadd [#allocation28], %s621
          %s624 = sshll.u32 [#allocation29], 4
          %s625 = int_to_ptr.vmem [resolvable:$true] %s624
          %627 = dma.hbm_to_vmem [thread:$0]  %s16, 16, %s625, [#allocation28]
        $region76: #{tpu_custom_call.1} parent=11 // pred_fallthru
          _
      $region12: #{tpu_custom_call.1} parent=5 // pred_fallthru
        _
      %p628 = scmp.lt.s32.totalorder %s37, 2
      // Predicated region
      $region77: #{tpu_custom_call.1} parent=5 // pred_check
        %p629 = pneg %p628
      $region78: #{tpu_custom_call.1} parent=5 // pred_check_branch
        %631 = sbr.rel (%p629) target = $region80
      $region79: #{tpu_custom_call.1} parent=5 // pred_region
        // Predicated region
        $region81: #{tpu_custom_call.1} parent=79 // pred_check
          %p632 = pneg %p57
        $region82: #{tpu_custom_call.1} parent=79 // pred_check_branch
          %634 = sbr.rel (%p632) target = $region84
        $region83: #{tpu_custom_call.1} parent=79 // pred_region
          %s635 = sand.u32 %s47, 1
          %s636 = scalar_lea.sflag [#allocation4], %s635
          %s637 = sand.u32 %s47, 1
          %s638 = smul.addr %s637, 8
          %s639 = scalar_lea.vmem [#allocation3], %s638
          %s641 = ssub.s32 128, 128
          %642 = vsyncadd %s636, %s641
          %s643 = smul.addr %s37, 128
          %s644 = scalar_lea.hbm %s0, %s643
          %s646 = sshll.u32 %s639, 4
          %s647 = int_to_ptr.vmem [resolvable:$true] %s646
          %649 = dma.hbm_to_vmem [thread:$0]  %s644, 128, %s647, %s636
        $region84: #{tpu_custom_call.1} parent=79 // pred_fallthru
          _
      $region80: #{tpu_custom_call.1} parent=5 // pred_fallthru
        _
      %p650 = scmp.le.s32.totalorder 1, %s37
      %p651 = scmp.lt.s32.totalorder %s37, 3
      %p652 = pnand %p650, %p651
      %p653 = pneg %p652
      // Predicated region
      $region85: #{tpu_custom_call.1} parent=5 // pred_check
        _
      $region86: #{tpu_custom_call.1} parent=5 // pred_check_branch
        %655 = sbr.rel (%p652) target = $region88
      $region87: #{tpu_custom_call.1} parent=5 // pred_region
        %s656 = ssub.s32 %s37, 1
        %s657 = sand.u32 %s50, 1
        %s658 = scalar_lea.sflag [#allocation4], %s657
        %s659 = sand.u32 %s50, 1
        %s660 = smul.addr %s659, 8
        %s661 = scalar_lea.vmem [#allocation3], %s660
        // Predicated region
        $region89: #{tpu_custom_call.1} parent=87 // pred_check
          %p662 = pneg %p63
        $region90: #{tpu_custom_call.1} parent=87 // pred_check_branch
          %664 = sbr.rel (%p662) target = $region92
        $region91: #{tpu_custom_call.1} parent=87 // pred_region
          %665 = dma.done %s658, 128
        $region92: #{tpu_custom_call.1} parent=87 // pred_fallthru
          _
        // Predicated region
        $region93: #{tpu_custom_call.1} parent=87 // pred_check
          %p666 = pneg %p84
        $region94: #{tpu_custom_call.1} parent=87 // pred_check_branch
          %668 = sbr.rel (%p666) target = $region96
        $region95: #{tpu_custom_call.1} parent=87 // pred_region
          %669 = dma.done [#allocation7], 512
        $region96: #{tpu_custom_call.1} parent=87 // pred_fallthru
          _
        // Predicated region
        $region97: #{tpu_custom_call.1} parent=87 // pred_check
          %p670 = pneg %p105
        $region98: #{tpu_custom_call.1} parent=87 // pred_check_branch
          %672 = sbr.rel (%p670) target = $region100
        $region99: #{tpu_custom_call.1} parent=87 // pred_region
          %673 = dma.done [#allocation7], 16
        $region100: #{tpu_custom_call.1} parent=87 // pred_fallthru
          _
        // Predicated region
        $region101: #{tpu_custom_call.1} parent=87 // pred_check
          %p674 = pneg %p126
        $region102: #{tpu_custom_call.1} parent=87 // pred_check_branch
          %676 = sbr.rel (%p674) target = $region104
        $region103: #{tpu_custom_call.1} parent=87 // pred_region
          %677 = dma.done [#allocation10], 512
        $region104: #{tpu_custom_call.1} parent=87 // pred_fallthru
          _
        // Predicated region
        $region105: #{tpu_custom_call.1} parent=87 // pred_check
          %p678 = pneg %p147
        $region106: #{tpu_custom_call.1} parent=87 // pred_check_branch
          %680 = sbr.rel (%p678) target = $region108
        $region107: #{tpu_custom_call.1} parent=87 // pred_region
          %681 = dma.done [#allocation10], 16
        $region108: #{tpu_custom_call.1} parent=87 // pred_fallthru
          _
        // Predicated region
        $region109: #{tpu_custom_call.1} parent=87 // pred_check
          %p682 = pneg %p168
        $region110: #{tpu_custom_call.1} parent=87 // pred_check_branch
          %684 = sbr.rel (%p682) target = $region112
        $region111: #{tpu_custom_call.1} parent=87 // pred_region
          %685 = dma.done [#allocation13], 512
        $region112: #{tpu_custom_call.1} parent=87 // pred_fallthru
          _
        // Predicated region
        $region113: #{tpu_custom_call.1} parent=87 // pred_check
          %p686 = pneg %p189
        $region114: #{tpu_custom_call.1} parent=87 // pred_check_branch
          %688 = sbr.rel (%p686) target = $region116
        $region115: #{tpu_custom_call.1} parent=87 // pred_region
          %689 = dma.done [#allocation13], 16
        $region116: #{tpu_custom_call.1} parent=87 // pred_fallthru
          _
        // Predicated region
        $region117: #{tpu_custom_call.1} parent=87 // pred_check
          %p690 = pneg %p210
        $region118: #{tpu_custom_call.1} parent=87 // pred_check_branch
          %692 = sbr.rel (%p690) target = $region120
        $region119: #{tpu_custom_call.1} parent=87 // pred_region
          %693 = dma.done [#allocation16], 512
        $region120: #{tpu_custom_call.1} parent=87 // pred_fallthru
          _
        // Predicated region
        $region121: #{tpu_custom_call.1} parent=87 // pred_check
          %p694 = pneg %p231
        $region122: #{tpu_custom_call.1} parent=87 // pred_check_branch
          %696 = sbr.rel (%p694) target = $region124
        $region123: #{tpu_custom_call.1} parent=87 // pred_region
          %697 = dma.done [#allocation16], 16
        $region124: #{tpu_custom_call.1} parent=87 // pred_fallthru
          _
        // Predicated region
        $region125: #{tpu_custom_call.1} parent=87 // pred_check
          %p698 = pneg %p252
        $region126: #{tpu_custom_call.1} parent=87 // pred_check_branch
          %700 = sbr.rel (%p698) target = $region128
        $region127: #{tpu_custom_call.1} parent=87 // pred_region
          %701 = dma.done [#allocation19], 16
        $region128: #{tpu_custom_call.1} parent=87 // pred_fallthru
          _
        // Predicated region
        $region129: #{tpu_custom_call.1} parent=87 // pred_check
          %p702 = pneg %p273
        $region130: #{tpu_custom_call.1} parent=87 // pred_check_branch
          %704 = sbr.rel (%p702) target = $region132
        $region131: #{tpu_custom_call.1} parent=87 // pred_region
          %705 = dma.done [#allocation19], 16
        $region132: #{tpu_custom_call.1} parent=87 // pred_fallthru
          _
        // Predicated region
        $region133: #{tpu_custom_call.1} parent=87 // pred_check
          %p706 = pneg %p294
        $region134: #{tpu_custom_call.1} parent=87 // pred_check_branch
          %708 = sbr.rel (%p706) target = $region136
        $region135: #{tpu_custom_call.1} parent=87 // pred_region
          %709 = dma.done [#allocation22], 512
        $region136: #{tpu_custom_call.1} parent=87 // pred_fallthru
          _
        // Predicated region
        $region137: #{tpu_custom_call.1} parent=87 // pred_check
          %p710 = pneg %p315
        $region138: #{tpu_custom_call.1} parent=87 // pred_check_branch
          %712 = sbr.rel (%p710) target = $region140
        $region139: #{tpu_custom_call.1} parent=87 // pred_region
          %713 = dma.done [#allocation22], 16
        $region140: #{tpu_custom_call.1} parent=87 // pred_fallthru
          _
        // Predicated region
        $region141: #{tpu_custom_call.1} parent=87 // pred_check
          %p714 = pneg %p336
        $region142: #{tpu_custom_call.1} parent=87 // pred_check_branch
          %716 = sbr.rel (%p714) target = $region144
        $region143: #{tpu_custom_call.1} parent=87 // pred_region
          %717 = dma.done [#allocation25], 1024
        $region144: #{tpu_custom_call.1} parent=87 // pred_fallthru
          _
        // Predicated region
        $region145: #{tpu_custom_call.1} parent=87 // pred_check
          %p718 = pneg %p357
        $region146: #{tpu_custom_call.1} parent=87 // pred_check_branch
          %720 = sbr.rel (%p718) target = $region148
        $region147: #{tpu_custom_call.1} parent=87 // pred_region
          %721 = dma.done [#allocation25], 16
        $region148: #{tpu_custom_call.1} parent=87 // pred_fallthru
          _
        // Predicated region
        $region149: #{tpu_custom_call.1} parent=87 // pred_check
          %p722 = pneg %p378
        $region150: #{tpu_custom_call.1} parent=87 // pred_check_branch
          %724 = sbr.rel (%p722) target = $region152
        $region151: #{tpu_custom_call.1} parent=87 // pred_region
          %725 = dma.done [#allocation28], 16
        $region152: #{tpu_custom_call.1} parent=87 // pred_fallthru
          _
        // Predicated region
        $region153: #{tpu_custom_call.1} parent=87 // pred_check
          %p726 = pneg %p399
        $region154: #{tpu_custom_call.1} parent=87 // pred_check_branch
          %728 = sbr.rel (%p726) target = $region156
        $region155: #{tpu_custom_call.1} parent=87 // pred_region
          %729 = dma.done [#allocation28], 16
        $region156: #{tpu_custom_call.1} parent=87 // pred_fallthru
          _
        %s730 = sand.u32 %s50, 1
        %s731 = scalar_lea.sflag [#allocation4], %s730
        %s732 = sand.u32 %s50, 1
        %s733 = smul.addr %s732, 8
        %s734 = scalar_lea.vmem [#allocation3], %s733
        %p735 = pneg %p63
        %p736 = pneg %p60
        %p737 = pneg %p84
        %p738 = pneg %p81
        %p739 = pneg %p105
        %p740 = pneg %p102
        %p741 = pneg %p126
        %p742 = pneg %p123
        %p743 = pneg %p147
        %p744 = pneg %p144
        %p745 = pneg %p168
        %p746 = pneg %p165
        %p747 = pneg %p189
        %p748 = pneg %p186
        %p749 = pneg %p210
        %p750 = pneg %p207
        %p751 = pneg %p231
        %p752 = pneg %p228
        %p753 = pneg %p252
        %p754 = pneg %p249
        %p755 = pneg %p273
        %p756 = pneg %p270
        %p757 = pneg %p294
        %p758 = pneg %p291
        %p759 = pneg %p315
        %p760 = pneg %p312
        %p761 = pneg %p336
        %p762 = pneg %p333
        %p763 = pneg %p357
        %p764 = pneg %p354
        %p765 = pneg %p378
        %p766 = pneg %p375
        %p767 = pneg %p399
        %p768 = pneg %p396
        %p769 = pneg %p425
        %p770 = pneg %p422
        %s771 = sand.u32 %s412, 1
        %s772 = scalar_lea.sflag [#allocation5], %s771
        %s773 = sand.u32 %s412, 1
        %s774 = smul.addr %s773, 8
        %s775 = scalar_lea.vmem [#allocation30], %s774
        %v776 = vld [vmem:[#allocation8] sm:$0x1]
        %v777 = vld [vmem:[#allocation11] sm:$0x1]
        %v778 = vld [vmem:[#allocation14] sm:$0x1]
        %v779 = vld [vmem:[#allocation17] sm:$0x1]
        %v780 = vld [vmem:[#allocation26] sm:$0x1]
        %v781 = vld [vmem:[#allocation18] sm:$0x1]
        %v782 = vld [vmem:[#allocation20] sm:$0x1]
        %v783 = vld [vmem:[#allocation27] sm:$0x1]
        %v784 = vld [vmem:[#allocation29] sm:$0x1]
        %v785 = vld [vmem:[#allocation23] sm:$0x1]
        %v786 = vld [vmem:[%s661] sm:$0xff]
        %v787 = vld [vmem:[#allocation6] sm:$0xff]
        %v788 = vld [vmem:[#allocation6 + $0x8] sm:$0xff]
        %v789 = vld [vmem:[#allocation6 + $0x10] sm:$0xff]
        %v790 = vld [vmem:[#allocation6 + $0x18] sm:$0xff]
        %v792 = vlaneseq
        %v793 = vshrl.u32 %v792, 7
        %v794 = vsub.s32 0, %v793
        %v795 = vrot.slane %v776, %v794
        %vm797 = vcmask 261120
        %v799 = vsel %vm797, %v786, 0
        %801 = vmatprep.subr.mxu0 0.0
        %802 = vmatpush1.msra.mxu0 %v787
        %803 = vmatprep.subr.mxu0 0.0
        %804 = vmatpush1.msra.mxu0 %v788
        %805 = vmatprep.subr.mxu0 0.0
        %806 = vmatpush1.msra.mxu0 %v789
        %807 = vmatprep.subr.mxu0 0.0
        %808 = vmatpush1.msra.mxu0 %v790
        %809 = vmatprep.subr.mxu0 0.0
        %810 = vmatpush1.msra.mxu0 0.0
        %811 = vmatprep.subr.mxu0 0.0
        %812 = vmatpush1.msra.mxu0 0.0
        %813 = vmatprep.subr.mxu0 0.0
        %814 = vmatpush1.msra.mxu0 0.0
        %815 = vmatprep.subr.mxu0 0.0
        %816 = vmatpush1.msra.mxu0 0.0
        %817 = vmatprep.subr.mxu0 0.0
        %818 = vmatpush1.msra.mxu0 0.0
        %819 = vmatprep.subr.mxu0 0.0
        %820 = vmatpush1.msra.mxu0 0.0
        %821 = vmatprep.subr.mxu0 0.0
        %822 = vmatpush1.msra.mxu0 0.0
        %823 = vmatprep.subr.mxu0 0.0
        %824 = vmatpush1.msra.mxu0 0.0
        %825 = vmatprep.subr.mxu0 0.0
        %826 = vmatpush1.msra.mxu0 0.0
        %827 = vmatprep.subr.mxu0 0.0
        %828 = vmatpush1.msra.mxu0 0.0
        %829 = vmatprep.subr.mxu0 0.0
        %830 = vmatpush1.msra.mxu0 0.0
        %831 = vmatprep.subr.mxu0 0.0
        %832 = vmatpush1.msra.mxu0 0.0
        %833 = vmatprep.subr.mxu0 0.0
        %834 = vmatpush1.msra.mxu0 0.0
        %835 = vmatprep.subr.mxu0 0.0
        %836 = vmatpush1.msra.mxu0 0.0
        %837 = vmatprep.subr.mxu0 0.0
        %838 = vmatpush1.msra.mxu0 0.0
        %839 = vmatprep.subr.mxu0 0.0
        %840 = vmatpush1.msra.mxu0 0.0
        %841 = vmatprep.subr.mxu0 0.0
        %842 = vmatpush1.msra.mxu0 0.0
        %843 = vmatprep.subr.mxu0 0.0
        %844 = vmatpush1.msra.mxu0 0.0
        %845 = vmatprep.subr.mxu0 0.0
        %846 = vmatpush1.msra.mxu0 0.0
        %847 = vmatprep.subr.mxu0 0.0
        %848 = vmatpush1.msra.mxu0 0.0
        %849 = vmatprep.subr.mxu0 0.0
        %850 = vmatpush1.msra.mxu0 0.0
        %851 = vmatprep.subr.mxu0 0.0
        %852 = vmatpush1.msra.mxu0 0.0
        %853 = vmatprep.subr.mxu0 0.0
        %854 = vmatpush1.msra.mxu0 0.0
        %855 = vmatprep.subr.mxu0 0.0
        %856 = vmatpush1.msra.mxu0 0.0
        %857 = vmatprep.subr.mxu0 0.0
        %858 = vmatpush1.msra.mxu0 0.0
        %859 = vmatprep.subr.mxu0 0.0
        %860 = vmatpush1.msra.mxu0 0.0
        %861 = vmatprep.subr.mxu0 0.0
        %862 = vmatpush1.msra.mxu0 0.0
        %863 = vmatprep.subr.mxu0 0.0
        %864 = vmatpush1.msra.mxu0 0.0
        %865 = vmatprep.mubr.f32.mxu0 0.0
        %866 = vmatmul.mubr.f32.gmra.mrb[0].mxu0 %v799
        %v867 = vpop.f32.mrb[0].mxu0
        %v868 = vadd.f32 %v795, %v867
        %v869 = vpop.f32.mrb[0].mxu0
        %870 = vdwg.mxu0
        %v871 = vld [vmem:[#allocation9] sm:$0xff]
        %v872 = vld [vmem:[#allocation9 + $0x8] sm:$0xff]
        %v873 = vld [vmem:[#allocation9 + $0x10] sm:$0xff]
        %v874 = vld [vmem:[#allocation9 + $0x18] sm:$0xff]
        %v876 = vlaneseq
        %v877 = vshrl.u32 %v876, 7
        %v878 = vsub.s32 0, %v877
        %v879 = vrot.slane %v777, %v878
        %881 = vmatprep.subr.mxu0 0.0
        %882 = vmatpush1.msra.mxu0 %v871
        %883 = vmatprep.subr.mxu0 0.0
        %884 = vmatpush1.msra.mxu0 %v872
        %885 = vmatprep.subr.mxu0 0.0
        %886 = vmatpush1.msra.mxu0 %v873
        %887 = vmatprep.subr.mxu0 0.0
        %888 = vmatpush1.msra.mxu0 %v874
        %889 = vmatprep.subr.mxu0 0.0
        %890 = vmatpush1.msra.mxu0 0.0
        %891 = vmatprep.subr.mxu0 0.0
        %892 = vmatpush1.msra.mxu0 0.0
        %893 = vmatprep.subr.mxu0 0.0
        %894 = vmatpush1.msra.mxu0 0.0
        %895 = vmatprep.subr.mxu0 0.0
        %896 = vmatpush1.msra.mxu0 0.0
        %897 = vmatprep.subr.mxu0 0.0
        %898 = vmatpush1.msra.mxu0 0.0
        %899 = vmatprep.subr.mxu0 0.0
        %900 = vmatpush1.msra.mxu0 0.0
        %901 = vmatprep.subr.mxu0 0.0
        %902 = vmatpush1.msra.mxu0 0.0
        %903 = vmatprep.subr.mxu0 0.0
        %904 = vmatpush1.msra.mxu0 0.0
        %905 = vmatprep.subr.mxu0 0.0
        %906 = vmatpush1.msra.mxu0 0.0
        %907 = vmatprep.subr.mxu0 0.0
        %908 = vmatpush1.msra.mxu0 0.0
        %909 = vmatprep.subr.mxu0 0.0
        %910 = vmatpush1.msra.mxu0 0.0
        %911 = vmatprep.subr.mxu0 0.0
        %912 = vmatpush1.msra.mxu0 0.0
        %913 = vmatprep.subr.mxu0 0.0
        %914 = vmatpush1.msra.mxu0 0.0
        %915 = vmatprep.subr.mxu0 0.0
        %916 = vmatpush1.msra.mxu0 0.0
        %917 = vmatprep.subr.mxu0 0.0
        %918 = vmatpush1.msra.mxu0 0.0
        %919 = vmatprep.subr.mxu0 0.0
        %920 = vmatpush1.msra.mxu0 0.0
        %921 = vmatprep.subr.mxu0 0.0
        %922 = vmatpush1.msra.mxu0 0.0
        %923 = vmatprep.subr.mxu0 0.0
        %924 = vmatpush1.msra.mxu0 0.0
        %925 = vmatprep.subr.mxu0 0.0
        %926 = vmatpush1.msra.mxu0 0.0
        %927 = vmatprep.subr.mxu0 0.0
        %928 = vmatpush1.msra.mxu0 0.0
        %929 = vmatprep.subr.mxu0 0.0
        %930 = vmatpush1.msra.mxu0 0.0
        %931 = vmatprep.subr.mxu0 0.0
        %932 = vmatpush1.msra.mxu0 0.0
        %933 = vmatprep.subr.mxu0 0.0
        %934 = vmatpush1.msra.mxu0 0.0
        %935 = vmatprep.subr.mxu0 0.0
        %936 = vmatpush1.msra.mxu0 0.0
        %937 = vmatprep.subr.mxu0 0.0
        %938 = vmatpush1.msra.mxu0 0.0
        %939 = vmatprep.subr.mxu0 0.0
        %940 = vmatpush1.msra.mxu0 0.0
        %941 = vmatprep.subr.mxu0 0.0
        %942 = vmatpush1.msra.mxu0 0.0
        %943 = vmatprep.subr.mxu0 0.0
        %944 = vmatpush1.msra.mxu0 0.0
        %945 = vmatprep.mubr.f32.mxu0 0.0
        %946 = vmatmul.mubr.f32.gmra.mrb[0].mxu0 %v799
        %v947 = vpop.f32.mrb[0].mxu0
        %v948 = vadd.f32 %v879, %v947
        %v949 = vpop.f32.mrb[0].mxu0
        %950 = vdwg.mxu0
        %v951 = vld [vmem:[#allocation12] sm:$0xff]
        %v952 = vld [vmem:[#allocation12 + $0x8] sm:$0xff]
        %v953 = vld [vmem:[#allocation12 + $0x10] sm:$0xff]
        %v954 = vld [vmem:[#allocation12 + $0x18] sm:$0xff]
        %v956 = vlaneseq
        %v957 = vshrl.u32 %v956, 7
        %v958 = vsub.s32 0, %v957
        %v959 = vrot.slane %v778, %v958
        %961 = vmatprep.subr.mxu0 0.0
        %962 = vmatpush1.msra.mxu0 %v951
        %963 = vmatprep.subr.mxu0 0.0
        %964 = vmatpush1.msra.mxu0 %v952
        %965 = vmatprep.subr.mxu0 0.0
        %966 = vmatpush1.msra.mxu0 %v953
        %967 = vmatprep.subr.mxu0 0.0
        %968 = vmatpush1.msra.mxu0 %v954
        %969 = vmatprep.subr.mxu0 0.0
        %970 = vmatpush1.msra.mxu0 0.0
        %971 = vmatprep.subr.mxu0 0.0
        %972 = vmatpush1.msra.mxu0 0.0
        %973 = vmatprep.subr.mxu0 0.0
        %974 = vmatpush1.msra.mxu0 0.0
        %975 = vmatprep.subr.mxu0 0.0
        %976 = vmatpush1.msra.mxu0 0.0
        %977 = vmatprep.subr.mxu0 0.0
        %978 = vmatpush1.msra.mxu0 0.0
        %979 = vmatprep.subr.mxu0 0.0
        %980 = vmatpush1.msra.mxu0 0.0
        %981 = vmatprep.subr.mxu0 0.0
        %982 = vmatpush1.msra.mxu0 0.0
        %983 = vmatprep.subr.mxu0 0.0
        %984 = vmatpush1.msra.mxu0 0.0
        %985 = vmatprep.subr.mxu0 0.0
        %986 = vmatpush1.msra.mxu0 0.0
        %987 = vmatprep.subr.mxu0 0.0
        %988 = vmatpush1.msra.mxu0 0.0
        %989 = vmatprep.subr.mxu0 0.0
        %990 = vmatpush1.msra.mxu0 0.0
        %991 = vmatprep.subr.mxu0 0.0
        %992 = vmatpush1.msra.mxu0 0.0
        %993 = vmatprep.subr.mxu0 0.0
        %994 = vmatpush1.msra.mxu0 0.0
        %995 = vmatprep.subr.mxu0 0.0
        %996 = vmatpush1.msra.mxu0 0.0
        %997 = vmatprep.subr.mxu0 0.0
        %998 = vmatpush1.msra.mxu0 0.0
        %999 = vmatprep.subr.mxu0 0.0
        %1000 = vmatpush1.msra.mxu0 0.0
        %1001 = vmatprep.subr.mxu0 0.0
        %1002 = vmatpush1.msra.mxu0 0.0
        %1003 = vmatprep.subr.mxu0 0.0
        %1004 = vmatpush1.msra.mxu0 0.0
        %1005 = vmatprep.subr.mxu0 0.0
        %1006 = vmatpush1.msra.mxu0 0.0
        %1007 = vmatprep.subr.mxu0 0.0
        %1008 = vmatpush1.msra.mxu0 0.0
        %1009 = vmatprep.subr.mxu0 0.0
        %1010 = vmatpush1.msra.mxu0 0.0
        %1011 = vmatprep.subr.mxu0 0.0
        %1012 = vmatpush1.msra.mxu0 0.0
        %1013 = vmatprep.subr.mxu0 0.0
        %1014 = vmatpush1.msra.mxu0 0.0
        %1015 = vmatprep.subr.mxu0 0.0
        %1016 = vmatpush1.msra.mxu0 0.0
        %1017 = vmatprep.subr.mxu0 0.0
        %1018 = vmatpush1.msra.mxu0 0.0
        %1019 = vmatprep.subr.mxu0 0.0
        %1020 = vmatpush1.msra.mxu0 0.0
        %1021 = vmatprep.subr.mxu0 0.0
        %1022 = vmatpush1.msra.mxu0 0.0
        %1023 = vmatprep.subr.mxu0 0.0
        %1024 = vmatpush1.msra.mxu0 0.0
        %1025 = vmatprep.mubr.f32.mxu0 0.0
        %1026 = vmatmul.mubr.f32.gmra.mrb[0].mxu0 %v799
        %v1027 = vpop.f32.mrb[0].mxu0
        %v1028 = vadd.f32 %v959, %v1027
        %v1029 = vpop.f32.mrb[0].mxu0
        %1030 = vdwg.mxu0
        %vm1031 = vcmask 64512
        %v1033 = vsel %vm1031, %v868, 0
        %v1036 = vsel %vm1031, %v948, 0
        %1038 = vmatprep.subr.mxu0 0.0
        %1039 = vmatpush1.xpose.msra.mxu0 %v1036
        %1040 = vmatprep.subr.mxu0 0.0
        %1041 = vmatpush1.xpose.msra.mxu0 0.0
        %1042 = vmatprep.subr.mxu0 0.0
        %1043 = vmatpush1.xpose.msra.mxu0 0.0
        %1044 = vmatprep.subr.mxu0 0.0
        %1045 = vmatpush1.xpose.msra.mxu0 0.0
        %1046 = vmatprep.subr.mxu0 0.0
        %1047 = vmatpush1.xpose.msra.mxu0 0.0
        %1048 = vmatprep.subr.mxu0 0.0
        %1049 = vmatpush1.xpose.msra.mxu0 0.0
        %1050 = vmatprep.subr.mxu0 0.0
        %1051 = vmatpush1.xpose.msra.mxu0 0.0
        %1052 = vmatprep.subr.mxu0 0.0
        %1053 = vmatpush1.xpose.msra.mxu0 0.0
        %1054 = vmatprep.subr.mxu0 0.0
        %1055 = vmatpush1.xpose.msra.mxu0 0.0
        %1056 = vmatprep.subr.mxu0 0.0
        %1057 = vmatpush1.xpose.msra.mxu0 0.0
        %1058 = vmatprep.subr.mxu0 0.0
        %1059 = vmatpush1.xpose.msra.mxu0 0.0
        %1060 = vmatprep.subr.mxu0 0.0
        %1061 = vmatpush1.xpose.msra.mxu0 0.0
        %1062 = vmatprep.subr.mxu0 0.0
        %1063 = vmatpush1.xpose.msra.mxu0 0.0
        %1064 = vmatprep.subr.mxu0 0.0
        %1065 = vmatpush1.xpose.msra.mxu0 0.0
        %1066 = vmatprep.subr.mxu0 0.0
        %1067 = vmatpush1.xpose.msra.mxu0 0.0
        %1068 = vmatprep.subr.mxu0 0.0
        %1069 = vmatpush1.xpose.msra.mxu0 0.0
        %1070 = vmatprep.subr.mxu0 0.0
        %1071 = vmatpush1.xpose.msra.mxu0 0.0
        %1072 = vmatprep.subr.mxu0 0.0
        %1073 = vmatpush1.xpose.msra.mxu0 0.0
        %1074 = vmatprep.subr.mxu0 0.0
        %1075 = vmatpush1.xpose.msra.mxu0 0.0
        %1076 = vmatprep.subr.mxu0 0.0
        %1077 = vmatpush1.xpose.msra.mxu0 0.0
        %1078 = vmatprep.subr.mxu0 0.0
        %1079 = vmatpush1.xpose.msra.mxu0 0.0
        %1080 = vmatprep.subr.mxu0 0.0
        %1081 = vmatpush1.xpose.msra.mxu0 0.0
        %1082 = vmatprep.subr.mxu0 0.0
        %1083 = vmatpush1.xpose.msra.mxu0 0.0
        %1084 = vmatprep.subr.mxu0 0.0
        %1085 = vmatpush1.xpose.msra.mxu0 0.0
        %1086 = vmatprep.subr.mxu0 0.0
        %1087 = vmatpush1.xpose.msra.mxu0 0.0
        %1088 = vmatprep.subr.mxu0 0.0
        %1089 = vmatpush1.xpose.msra.mxu0 0.0
        %1090 = vmatprep.subr.mxu0 0.0
        %1091 = vmatpush1.xpose.msra.mxu0 0.0
        %1092 = vmatprep.subr.mxu0 0.0
        %1093 = vmatpush1.xpose.msra.mxu0 0.0
        %1094 = vmatprep.subr.mxu0 0.0
        %1095 = vmatpush1.xpose.msra.mxu0 0.0
        %1096 = vmatprep.subr.mxu0 0.0
        %1097 = vmatpush1.xpose.msra.mxu0 0.0
        %1098 = vmatprep.subr.mxu0 0.0
        %1099 = vmatpush1.xpose.msra.mxu0 0.0
        %1100 = vmatprep.subr.mxu0 0.0
        %1101 = vmatpush1.xpose.msra.mxu0 0.0
        %1102 = vmatprep.mubr.f32.mxu0 0.0
        %1103 = vmatmul.mubr.f32.gmra.mrb[0].mxu0 %v1033
        %v1104 = vpop.f32.mrb[0].mxu0
        %v1105 = vadd.f32 0.0, %v1104
        %v1106 = vpop.f32.mrb[0].mxu0
        %1107 = vdwg.mxu0
        %v1108 = vsel %vm1031, %v1105, -inf
        %1109 = vmax.xlane.f32.xlu0 %v1108
        %v1110 = vpop.xlane.xlu0 %1109
        %v1111 = vsub.f32 %v1105, %v1110
        %v1112 = vmul.f32 %v1111, 1.442695
        %v1113 = vpow.pop %v1112
        %v1114 = vsel %vm1031, %v1113, 0.0
        %1115 = vadd.xlane.f32.xlu0 %v1114
        %v1116 = vpop.xlane.xlu0 %1115
        %v1117 = vrcp.pop %v1116
        %v1118 = vmul.f32 %v1113, %v1117
        %v1120 = vsel %vm1031, %v1118, 0
        %1122 = vmatprep.subr.mxu0 0.0
        %1123 = vmatpush1.msra.mxu0 %v1028
        %1124 = vmatprep.subr.mxu0 0.0
        %1125 = vmatpush1.msra.mxu0 0.0
        %1126 = vmatprep.subr.mxu0 0.0
        %1127 = vmatpush1.msra.mxu0 0.0
        %1128 = vmatprep.subr.mxu0 0.0
        %1129 = vmatpush1.msra.mxu0 0.0
        %1130 = vmatprep.subr.mxu0 0.0
        %1131 = vmatpush1.msra.mxu0 0.0
        %1132 = vmatprep.subr.mxu0 0.0
        %1133 = vmatpush1.msra.mxu0 0.0
        %1134 = vmatprep.subr.mxu0 0.0
        %1135 = vmatpush1.msra.mxu0 0.0
        %1136 = vmatprep.subr.mxu0 0.0
        %1137 = vmatpush1.msra.mxu0 0.0
        %1138 = vmatprep.subr.mxu0 0.0
        %1139 = vmatpush1.msra.mxu0 0.0
        %1140 = vmatprep.subr.mxu0 0.0
        %1141 = vmatpush1.msra.mxu0 0.0
        %1142 = vmatprep.subr.mxu0 0.0
        %1143 = vmatpush1.msra.mxu0 0.0
        %1144 = vmatprep.subr.mxu0 0.0
        %1145 = vmatpush1.msra.mxu0 0.0
        %1146 = vmatprep.subr.mxu0 0.0
        %1147 = vmatpush1.msra.mxu0 0.0
        %1148 = vmatprep.subr.mxu0 0.0
        %1149 = vmatpush1.msra.mxu0 0.0
        %1150 = vmatprep.subr.mxu0 0.0
        %1151 = vmatpush1.msra.mxu0 0.0
        %1152 = vmatprep.subr.mxu0 0.0
        %1153 = vmatpush1.msra.mxu0 0.0
        %1154 = vmatprep.subr.mxu0 0.0
        %1155 = vmatpush1.msra.mxu0 0.0
        %1156 = vmatprep.subr.mxu0 0.0
        %1157 = vmatpush1.msra.mxu0 0.0
        %1158 = vmatprep.subr.mxu0 0.0
        %1159 = vmatpush1.msra.mxu0 0.0
        %1160 = vmatprep.subr.mxu0 0.0
        %1161 = vmatpush1.msra.mxu0 0.0
        %1162 = vmatprep.subr.mxu0 0.0
        %1163 = vmatpush1.msra.mxu0 0.0
        %1164 = vmatprep.subr.mxu0 0.0
        %1165 = vmatpush1.msra.mxu0 0.0
        %1166 = vmatprep.subr.mxu0 0.0
        %1167 = vmatpush1.msra.mxu0 0.0
        %1168 = vmatprep.subr.mxu0 0.0
        %1169 = vmatpush1.msra.mxu0 0.0
        %1170 = vmatprep.subr.mxu0 0.0
        %1171 = vmatpush1.msra.mxu0 0.0
        %1172 = vmatprep.subr.mxu0 0.0
        %1173 = vmatpush1.msra.mxu0 0.0
        %1174 = vmatprep.subr.mxu0 0.0
        %1175 = vmatpush1.msra.mxu0 0.0
        %1176 = vmatprep.subr.mxu0 0.0
        %1177 = vmatpush1.msra.mxu0 0.0
        %1178 = vmatprep.subr.mxu0 0.0
        %1179 = vmatpush1.msra.mxu0 0.0
        %1180 = vmatprep.subr.mxu0 0.0
        %1181 = vmatpush1.msra.mxu0 0.0
        %1182 = vmatprep.subr.mxu0 0.0
        %1183 = vmatpush1.msra.mxu0 0.0
        %1184 = vmatprep.subr.mxu0 0.0
        %1185 = vmatpush1.msra.mxu0 0.0
        %1186 = vmatprep.mubr.f32.mxu0 0.0
        %1187 = vmatmul.mubr.f32.gmra.mrb[0].mxu0 %v1120
        %v1188 = vpop.f32.mrb[0].mxu0
        %v1189 = vadd.f32 0.0, %v1188
        %v1190 = vpop.f32.mrb[0].mxu0
        %1191 = vdwg.mxu0
        %1192 = vst.msk [vmem:[#allocation2] sm:$0xff] %vm1031, %v1189
        %1193 = vrot.lane.b32.xlu0 %v868, 120
        %v1194 = vpop.permute.xlu0 %1193
        %1195 = vrot.lane.b32.xlu0 %v948, 120
        %v1196 = vpop.permute.xlu0 %1195
        %v1197 = vsel %vm1031, %v1194, 0
        %v1199 = vsel %vm1031, %v1196, 0
        %1201 = vmatprep.subr.mxu0 0.0
        %1202 = vmatpush1.xpose.msra.mxu0 %v1199
        %1203 = vmatprep.subr.mxu0 0.0
        %1204 = vmatpush1.xpose.msra.mxu0 0.0
        %1205 = vmatprep.subr.mxu0 0.0
        %1206 = vmatpush1.xpose.msra.mxu0 0.0
        %1207 = vmatprep.subr.mxu0 0.0
        %1208 = vmatpush1.xpose.msra.mxu0 0.0
        %1209 = vmatprep.subr.mxu0 0.0
        %1210 = vmatpush1.xpose.msra.mxu0 0.0
        %1211 = vmatprep.subr.mxu0 0.0
        %1212 = vmatpush1.xpose.msra.mxu0 0.0
        %1213 = vmatprep.subr.mxu0 0.0
        %1214 = vmatpush1.xpose.msra.mxu0 0.0
        %1215 = vmatprep.subr.mxu0 0.0
        %1216 = vmatpush1.xpose.msra.mxu0 0.0
        %1217 = vmatprep.subr.mxu0 0.0
        %1218 = vmatpush1.xpose.msra.mxu0 0.0
        %1219 = vmatprep.subr.mxu0 0.0
        %1220 = vmatpush1.xpose.msra.mxu0 0.0
        %1221 = vmatprep.subr.mxu0 0.0
        %1222 = vmatpush1.xpose.msra.mxu0 0.0
        %1223 = vmatprep.subr.mxu0 0.0
        %1224 = vmatpush1.xpose.msra.mxu0 0.0
        %1225 = vmatprep.subr.mxu0 0.0
        %1226 = vmatpush1.xpose.msra.mxu0 0.0
        %1227 = vmatprep.subr.mxu0 0.0
        %1228 = vmatpush1.xpose.msra.mxu0 0.0
        %1229 = vmatprep.subr.mxu0 0.0
        %1230 = vmatpush1.xpose.msra.mxu0 0.0
        %1231 = vmatprep.subr.mxu0 0.0
        %1232 = vmatpush1.xpose.msra.mxu0 0.0
        %1233 = vmatprep.subr.mxu0 0.0
        %1234 = vmatpush1.xpose.msra.mxu0 0.0
        %1235 = vmatprep.subr.mxu0 0.0
        %1236 = vmatpush1.xpose.msra.mxu0 0.0
        %1237 = vmatprep.subr.mxu0 0.0
        %1238 = vmatpush1.xpose.msra.mxu0 0.0
        %1239 = vmatprep.subr.mxu0 0.0
        %1240 = vmatpush1.xpose.msra.mxu0 0.0
        %1241 = vmatprep.subr.mxu0 0.0
        %1242 = vmatpush1.xpose.msra.mxu0 0.0
        %1243 = vmatprep.subr.mxu0 0.0
        %1244 = vmatpush1.xpose.msra.mxu0 0.0
        %1245 = vmatprep.subr.mxu0 0.0
        %1246 = vmatpush1.xpose.msra.mxu0 0.0
        %1247 = vmatprep.subr.mxu0 0.0
        %1248 = vmatpush1.xpose.msra.mxu0 0.0
        %1249 = vmatprep.subr.mxu0 0.0
        %1250 = vmatpush1.xpose.msra.mxu0 0.0
        %1251 = vmatprep.subr.mxu0 0.0
        %1252 = vmatpush1.xpose.msra.mxu0 0.0
        %1253 = vmatprep.subr.mxu0 0.0
        %1254 = vmatpush1.xpose.msra.mxu0 0.0
        %1255 = vmatprep.subr.mxu0 0.0
        %1256 = vmatpush1.xpose.msra.mxu0 0.0
        %1257 = vmatprep.subr.mxu0 0.0
        %1258 = vmatpush1.xpose.msra.mxu0 0.0
        %1259 = vmatprep.subr.mxu0 0.0
        %1260 = vmatpush1.xpose.msra.mxu0 0.0
        %1261 = vmatprep.subr.mxu0 0.0
        %1262 = vmatpush1.xpose.msra.mxu0 0.0
        %1263 = vmatprep.subr.mxu0 0.0
        %1264 = vmatpush1.xpose.msra.mxu0 0.0
        %1265 = vmatprep.mubr.f32.mxu0 0.0
        %1266 = vmatmul.mubr.f32.gmra.mrb[0].mxu0 %v1197
        %v1267 = vpop.f32.mrb[0].mxu0
        %v1268 = vadd.f32 0.0, %v1267
        %v1269 = vpop.f32.mrb[0].mxu0
        %1270 = vdwg.mxu0
        %v1271 = vsel %vm1031, %v1268, -inf
        %1272 = vmax.xlane.f32.xlu0 %v1271
        %v1273 = vpop.xlane.xlu0 %1272
        %v1274 = vsub.f32 %v1268, %v1273
        %v1275 = vmul.f32 %v1274, 1.442695
        %v1276 = vpow.pop %v1275
        %v1277 = vsel %vm1031, %v1276, 0.0
        %1278 = vadd.xlane.f32.xlu0 %v1277
        %v1279 = vpop.xlane.xlu0 %1278
        %v1280 = vrcp.pop %v1279
        %v1281 = vmul.f32 %v1276, %v1280
        %1283 = vrot.lane.b32.xlu0 %v1028, 120
        %v1284 = vpop.permute.xlu0 %1283
        %v1287 = vsel %vm1031, %v1281, 0
        %1289 = vmatprep.subr.mxu0 0.0
        %1290 = vmatpush1.msra.mxu0 %v1284
        %1291 = vmatprep.subr.mxu0 0.0
        %1292 = vmatpush1.msra.mxu0 0.0
        %1293 = vmatprep.subr.mxu0 0.0
        %1294 = vmatpush1.msra.mxu0 0.0
        %1295 = vmatprep.subr.mxu0 0.0
        %1296 = vmatpush1.msra.mxu0 0.0
        %1297 = vmatprep.subr.mxu0 0.0
        %1298 = vmatpush1.msra.mxu0 0.0
        %1299 = vmatprep.subr.mxu0 0.0
        %1300 = vmatpush1.msra.mxu0 0.0
        %1301 = vmatprep.subr.mxu0 0.0
        %1302 = vmatpush1.msra.mxu0 0.0
        %1303 = vmatprep.subr.mxu0 0.0
        %1304 = vmatpush1.msra.mxu0 0.0
        %1305 = vmatprep.subr.mxu0 0.0
        %1306 = vmatpush1.msra.mxu0 0.0
        %1307 = vmatprep.subr.mxu0 0.0
        %1308 = vmatpush1.msra.mxu0 0.0
        %1309 = vmatprep.subr.mxu0 0.0
        %1310 = vmatpush1.msra.mxu0 0.0
        %1311 = vmatprep.subr.mxu0 0.0
        %1312 = vmatpush1.msra.mxu0 0.0
        %1313 = vmatprep.subr.mxu0 0.0
        %1314 = vmatpush1.msra.mxu0 0.0
        %1315 = vmatprep.subr.mxu0 0.0
        %1316 = vmatpush1.msra.mxu0 0.0
        %1317 = vmatprep.subr.mxu0 0.0
        %1318 = vmatpush1.msra.mxu0 0.0
        %1319 = vmatprep.subr.mxu0 0.0
        %1320 = vmatpush1.msra.mxu0 0.0
        %1321 = vmatprep.subr.mxu0 0.0
        %1322 = vmatpush1.msra.mxu0 0.0
        %1323 = vmatprep.subr.mxu0 0.0
        %1324 = vmatpush1.msra.mxu0 0.0
        %1325 = vmatprep.subr.mxu0 0.0
        %1326 = vmatpush1.msra.mxu0 0.0
        %1327 = vmatprep.subr.mxu0 0.0
        %1328 = vmatpush1.msra.mxu0 0.0
        %1329 = vmatprep.subr.mxu0 0.0
        %1330 = vmatpush1.msra.mxu0 0.0
        %1331 = vmatprep.subr.mxu0 0.0
        %1332 = vmatpush1.msra.mxu0 0.0
        %1333 = vmatprep.subr.mxu0 0.0
        %1334 = vmatpush1.msra.mxu0 0.0
        %1335 = vmatprep.subr.mxu0 0.0
        %1336 = vmatpush1.msra.mxu0 0.0
        %1337 = vmatprep.subr.mxu0 0.0
        %1338 = vmatpush1.msra.mxu0 0.0
        %1339 = vmatprep.subr.mxu0 0.0
        %1340 = vmatpush1.msra.mxu0 0.0
        %1341 = vmatprep.subr.mxu0 0.0
        %1342 = vmatpush1.msra.mxu0 0.0
        %1343 = vmatprep.subr.mxu0 0.0
        %1344 = vmatpush1.msra.mxu0 0.0
        %1345 = vmatprep.subr.mxu0 0.0
        %1346 = vmatpush1.msra.mxu0 0.0
        %1347 = vmatprep.subr.mxu0 0.0
        %1348 = vmatpush1.msra.mxu0 0.0
        %1349 = vmatprep.subr.mxu0 0.0
        %1350 = vmatpush1.msra.mxu0 0.0
        %1351 = vmatprep.subr.mxu0 0.0
        %1352 = vmatpush1.msra.mxu0 0.0
        %1353 = vmatprep.mubr.f32.mxu0 0.0
        %1354 = vmatmul.mubr.f32.gmra.mrb[0].mxu0 %v1287
        %v1355 = vpop.f32.mrb[0].mxu0
        %v1356 = vadd.f32 0.0, %v1355
        %v1357 = vpop.f32.mrb[0].mxu0
        %1358 = vdwg.mxu0
        %1360 = vrot.lane.b32.xlu0 %v1356, 8
        %v1361 = vpop.permute.xlu0 %1360
        %vm1363 = vcmask 130112
        %1364 = vst.msk [vmem:[#allocation2] sm:$0xff] %vm1363, %v1361
        %1365 = vrot.lane.b32.xlu0 %v868, 112
        %v1366 = vpop.permute.xlu0 %1365
        %1367 = vrot.lane.b32.xlu0 %v948, 112
        %v1368 = vpop.permute.xlu0 %1367
        %v1369 = vsel %vm1031, %v1366, 0
        %v1371 = vsel %vm1031, %v1368, 0
        %1373 = vmatprep.subr.mxu0 0.0
        %1374 = vmatpush1.xpose.msra.mxu0 %v1371
        %1375 = vmatprep.subr.mxu0 0.0
        %1376 = vmatpush1.xpose.msra.mxu0 0.0
        %1377 = vmatprep.subr.mxu0 0.0
        %1378 = vmatpush1.xpose.msra.mxu0 0.0
        %1379 = vmatprep.subr.mxu0 0.0
        %1380 = vmatpush1.xpose.msra.mxu0 0.0
        %1381 = vmatprep.subr.mxu0 0.0
        %1382 = vmatpush1.xpose.msra.mxu0 0.0
        %1383 = vmatprep.subr.mxu0 0.0
        %1384 = vmatpush1.xpose.msra.mxu0 0.0
        %1385 = vmatprep.subr.mxu0 0.0
        %1386 = vmatpush1.xpose.msra.mxu0 0.0
        %1387 = vmatprep.subr.mxu0 0.0
        %1388 = vmatpush1.xpose.msra.mxu0 0.0
        %1389 = vmatprep.subr.mxu0 0.0
        %1390 = vmatpush1.xpose.msra.mxu0 0.0
        %1391 = vmatprep.subr.mxu0 0.0
        %1392 = vmatpush1.xpose.msra.mxu0 0.0
        %1393 = vmatprep.subr.mxu0 0.0
        %1394 = vmatpush1.xpose.msra.mxu0 0.0
        %1395 = vmatprep.subr.mxu0 0.0
        %1396 = vmatpush1.xpose.msra.mxu0 0.0
        %1397 = vmatprep.subr.mxu0 0.0
        %1398 = vmatpush1.xpose.msra.mxu0 0.0
        %1399 = vmatprep.subr.mxu0 0.0
        %1400 = vmatpush1.xpose.msra.mxu0 0.0
        %1401 = vmatprep.subr.mxu0 0.0
        %1402 = vmatpush1.xpose.msra.mxu0 0.0
        %1403 = vmatprep.subr.mxu0 0.0
        %1404 = vmatpush1.xpose.msra.mxu0 0.0
        %1405 = vmatprep.subr.mxu0 0.0
        %1406 = vmatpush1.xpose.msra.mxu0 0.0
        %1407 = vmatprep.subr.mxu0 0.0
        %1408 = vmatpush1.xpose.msra.mxu0 0.0
        %1409 = vmatprep.subr.mxu0 0.0
        %1410 = vmatpush1.xpose.msra.mxu0 0.0
        %1411 = vmatprep.subr.mxu0 0.0
        %1412 = vmatpush1.xpose.msra.mxu0 0.0
        %1413 = vmatprep.subr.mxu0 0.0
        %1414 = vmatpush1.xpose.msra.mxu0 0.0
        %1415 = vmatprep.subr.mxu0 0.0
        %1416 = vmatpush1.xpose.msra.mxu0 0.0
        %1417 = vmatprep.subr.mxu0 0.0
        %1418 = vmatpush1.xpose.msra.mxu0 0.0
        %1419 = vmatprep.subr.mxu0 0.0
        %1420 = vmatpush1.xpose.msra.mxu0 0.0
        %1421 = vmatprep.subr.mxu0 0.0
        %1422 = vmatpush1.xpose.msra.mxu0 0.0
        %1423 = vmatprep.subr.mxu0 0.0
        %1424 = vmatpush1.xpose.msra.mxu0 0.0
        %1425 = vmatprep.subr.mxu0 0.0
        %1426 = vmatpush1.xpose.msra.mxu0 0.0
        %1427 = vmatprep.subr.mxu0 0.0
        %1428 = vmatpush1.xpose.msra.mxu0 0.0
        %1429 = vmatprep.subr.mxu0 0.0
        %1430 = vmatpush1.xpose.msra.mxu0 0.0
        %1431 = vmatprep.subr.mxu0 0.0
        %1432 = vmatpush1.xpose.msra.mxu0 0.0
        %1433 = vmatprep.subr.mxu0 0.0
        %1434 = vmatpush1.xpose.msra.mxu0 0.0
        %1435 = vmatprep.subr.mxu0 0.0
        %1436 = vmatpush1.xpose.msra.mxu0 0.0
        %1437 = vmatprep.mubr.f32.mxu0 0.0
        %1438 = vmatmul.mubr.f32.gmra.mrb[0].mxu0 %v1369
        %v1439 = vpop.f32.mrb[0].mxu0
        %v1440 = vadd.f32 0.0, %v1439
        %v1441 = vpop.f32.mrb[0].mxu0
        %1442 = vdwg.mxu0
        %v1443 = vsel %vm1031, %v1440, -inf
        %1444 = vmax.xlane.f32.xlu0 %v1443
        %v1445 = vpop.xlane.xlu0 %1444
        %v1446 = vsub.f32 %v1440, %v1445
        %v1447 = vmul.f32 %v1446, 1.442695
        %v1448 = vpow.pop %v1447
        %v1449 = vsel %vm1031, %v1448, 0.0
        %1450 = vadd.xlane.f32.xlu0 %v1449
        %v1451 = vpop.xlane.xlu0 %1450
        %v1452 = vrcp.pop %v1451
        %v1453 = vmul.f32 %v1448, %v1452
        %1454 = vrot.lane.b32.xlu0 %v1028, 112
        %v1455 = vpop.permute.xlu0 %1454
        %v1458 = vsel %vm1031, %v1453, 0
        %1460 = vmatprep.subr.mxu0 0.0
        %1461 = vmatpush1.msra.mxu0 %v1455
        %1462 = vmatprep.subr.mxu0 0.0
        %1463 = vmatpush1.msra.mxu0 0.0
        %1464 = vmatprep.subr.mxu0 0.0
        %1465 = vmatpush1.msra.mxu0 0.0
        %1466 = vmatprep.subr.mxu0 0.0
        %1467 = vmatpush1.msra.mxu0 0.0
        %1468 = vmatprep.subr.mxu0 0.0
        %1469 = vmatpush1.msra.mxu0 0.0
        %1470 = vmatprep.subr.mxu0 0.0
        %1471 = vmatpush1.msra.mxu0 0.0
        %1472 = vmatprep.subr.mxu0 0.0
        %1473 = vmatpush1.msra.mxu0 0.0
        %1474 = vmatprep.subr.mxu0 0.0
        %1475 = vmatpush1.msra.mxu0 0.0
        %1476 = vmatprep.subr.mxu0 0.0
        %1477 = vmatpush1.msra.mxu0 0.0
        %1478 = vmatprep.subr.mxu0 0.0
        %1479 = vmatpush1.msra.mxu0 0.0
        %1480 = vmatprep.subr.mxu0 0.0
        %1481 = vmatpush1.msra.mxu0 0.0
        %1482 = vmatprep.subr.mxu0 0.0
        %1483 = vmatpush1.msra.mxu0 0.0
        %1484 = vmatprep.subr.mxu0 0.0
        %1485 = vmatpush1.msra.mxu0 0.0
        %1486 = vmatprep.subr.mxu0 0.0
        %1487 = vmatpush1.msra.mxu0 0.0
        %1488 = vmatprep.subr.mxu0 0.0
        %1489 = vmatpush1.msra.mxu0 0.0
        %1490 = vmatprep.subr.mxu0 0.0
        %1491 = vmatpush1.msra.mxu0 0.0
        %1492 = vmatprep.subr.mxu0 0.0
        %1493 = vmatpush1.msra.mxu0 0.0
        %1494 = vmatprep.subr.mxu0 0.0
        %1495 = vmatpush1.msra.mxu0 0.0
        %1496 = vmatprep.subr.mxu0 0.0
        %1497 = vmatpush1.msra.mxu0 0.0
        %1498 = vmatprep.subr.mxu0 0.0
        %1499 = vmatpush1.msra.mxu0 0.0
        %1500 = vmatprep.subr.mxu0 0.0
        %1501 = vmatpush1.msra.mxu0 0.0
        %1502 = vmatprep.subr.mxu0 0.0
        %1503 = vmatpush1.msra.mxu0 0.0
        %1504 = vmatprep.subr.mxu0 0.0
        %1505 = vmatpush1.msra.mxu0 0.0
        %1506 = vmatprep.subr.mxu0 0.0
        %1507 = vmatpush1.msra.mxu0 0.0
        %1508 = vmatprep.subr.mxu0 0.0
        %1509 = vmatpush1.msra.mxu0 0.0
        %1510 = vmatprep.subr.mxu0 0.0
        %1511 = vmatpush1.msra.mxu0 0.0
        %1512 = vmatprep.subr.mxu0 0.0
        %1513 = vmatpush1.msra.mxu0 0.0
        %1514 = vmatprep.subr.mxu0 0.0
        %1515 = vmatpush1.msra.mxu0 0.0
        %1516 = vmatprep.subr.mxu0 0.0
        %1517 = vmatpush1.msra.mxu0 0.0
        %1518 = vmatprep.subr.mxu0 0.0
        %1519 = vmatpush1.msra.mxu0 0.0
        %1520 = vmatprep.subr.mxu0 0.0
        %1521 = vmatpush1.msra.mxu0 0.0
        %1522 = vmatprep.subr.mxu0 0.0
        %1523 = vmatpush1.msra.mxu0 0.0
        %1524 = vmatprep.mubr.f32.mxu0 0.0
        %1525 = vmatmul.mubr.f32.gmra.mrb[0].mxu0 %v1458
        %v1526 = vpop.f32.mrb[0].mxu0
        %v1527 = vadd.f32 0.0, %v1526
        %v1528 = vpop.f32.mrb[0].mxu0
        %1529 = vdwg.mxu0
        %1531 = vrot.lane.b32.xlu0 %v1527, 16
        %v1532 = vpop.permute.xlu0 %1531
        %vm1534 = vcmask 195712
        %1535 = vst.msk [vmem:[#allocation2] sm:$0xff] %vm1534, %v1532
        %1536 = vrot.lane.b32.xlu0 %v868, 104
        %v1537 = vpop.permute.xlu0 %1536
        %1538 = vrot.lane.b32.xlu0 %v948, 104
        %v1539 = vpop.permute.xlu0 %1538
        %v1540 = vsel %vm1031, %v1537, 0
        %v1542 = vsel %vm1031, %v1539, 0
        %1544 = vmatprep.subr.mxu0 0.0
        %1545 = vmatpush1.xpose.msra.mxu0 %v1542
        %1546 = vmatprep.subr.mxu0 0.0
        %1547 = vmatpush1.xpose.msra.mxu0 0.0
        %1548 = vmatprep.subr.mxu0 0.0
        %1549 = vmatpush1.xpose.msra.mxu0 0.0
        %1550 = vmatprep.subr.mxu0 0.0
        %1551 = vmatpush1.xpose.msra.mxu0 0.0
        %1552 = vmatprep.subr.mxu0 0.0
        %1553 = vmatpush1.xpose.msra.mxu0 0.0
        %1554 = vmatprep.subr.mxu0 0.0
        %1555 = vmatpush1.xpose.msra.mxu0 0.0
        %1556 = vmatprep.subr.mxu0 0.0
        %1557 = vmatpush1.xpose.msra.mxu0 0.0
        %1558 = vmatprep.subr.mxu0 0.0
        %1559 = vmatpush1.xpose.msra.mxu0 0.0
        %1560 = vmatprep.subr.mxu0 0.0
        %1561 = vmatpush1.xpose.msra.mxu0 0.0
        %1562 = vmatprep.subr.mxu0 0.0
        %1563 = vmatpush1.xpose.msra.mxu0 0.0
        %1564 = vmatprep.subr.mxu0 0.0
        %1565 = vmatpush1.xpose.msra.mxu0 0.0
        %1566 = vmatprep.subr.mxu0 0.0
        %1567 = vmatpush1.xpose.msra.mxu0 0.0
        %1568 = vmatprep.subr.mxu0 0.0
        %1569 = vmatpush1.xpose.msra.mxu0 0.0
        %1570 = vmatprep.subr.mxu0 0.0
        %1571 = vmatpush1.xpose.msra.mxu0 0.0
        %1572 = vmatprep.subr.mxu0 0.0
        %1573 = vmatpush1.xpose.msra.mxu0 0.0
        %1574 = vmatprep.subr.mxu0 0.0
        %1575 = vmatpush1.xpose.msra.mxu0 0.0
        %1576 = vmatprep.subr.mxu0 0.0
        %1577 = vmatpush1.xpose.msra.mxu0 0.0
        %1578 = vmatprep.subr.mxu0 0.0
        %1579 = vmatpush1.xpose.msra.mxu0 0.0
        %1580 = vmatprep.subr.mxu0 0.0
        %1581 = vmatpush1.xpose.msra.mxu0 0.0
        %1582 = vmatprep.subr.mxu0 0.0
        %1583 = vmatpush1.xpose.msra.mxu0 0.0
        %1584 = vmatprep.subr.mxu0 0.0
        %1585 = vmatpush1.xpose.msra.mxu0 0.0
        %1586 = vmatprep.subr.mxu0 0.0
        %1587 = vmatpush1.xpose.msra.mxu0 0.0
        %1588 = vmatprep.subr.mxu0 0.0
        %1589 = vmatpush1.xpose.msra.mxu0 0.0
        %1590 = vmatprep.subr.mxu0 0.0
        %1591 = vmatpush1.xpose.msra.mxu0 0.0
        %1592 = vmatprep.subr.mxu0 0.0
        %1593 = vmatpush1.xpose.msra.mxu0 0.0
        %1594 = vmatprep.subr.mxu0 0.0
        %1595 = vmatpush1.xpose.msra.mxu0 0.0
        %1596 = vmatprep.subr.mxu0 0.0
        %1597 = vmatpush1.xpose.msra.mxu0 0.0
        %1598 = vmatprep.subr.mxu0 0.0
        %1599 = vmatpush1.xpose.msra.mxu0 0.0
        %1600 = vmatprep.subr.mxu0 0.0
        %1601 = vmatpush1.xpose.msra.mxu0 0.0
        %1602 = vmatprep.subr.mxu0 0.0
        %1603 = vmatpush1.xpose.msra.mxu0 0.0
        %1604 = vmatprep.subr.mxu0 0.0
        %1605 = vmatpush1.xpose.msra.mxu0 0.0
        %1606 = vmatprep.subr.mxu0 0.0
        %1607 = vmatpush1.xpose.msra.mxu0 0.0
        %1608 = vmatprep.mubr.f32.mxu0 0.0
        %1609 = vmatmul.mubr.f32.gmra.mrb[0].mxu0 %v1540
        %v1610 = vpop.f32.mrb[0].mxu0
        %v1611 = vadd.f32 0.0, %v1610
        %v1612 = vpop.f32.mrb[0].mxu0
        %1613 = vdwg.mxu0
        %v1614 = vsel %vm1031, %v1611, -inf
        %1615 = vmax.xlane.f32.xlu0 %v1614
        %v1616 = vpop.xlane.xlu0 %1615
        %v1617 = vsub.f32 %v1611, %v1616
        %v1618 = vmul.f32 %v1617, 1.442695
        %v1619 = vpow.pop %v1618
        %v1620 = vsel %vm1031, %v1619, 0.0
        %1621 = vadd.xlane.f32.xlu0 %v1620
        %v1622 = vpop.xlane.xlu0 %1621
        %v1623 = vrcp.pop %v1622
        %v1624 = vmul.f32 %v1619, %v1623
        %1625 = vrot.lane.b32.xlu0 %v1028, 104
        %v1626 = vpop.permute.xlu0 %1625
        %v1629 = vsel %vm1031, %v1624, 0
        %1631 = vmatprep.subr.mxu0 0.0
        %1632 = vmatpush1.msra.mxu0 %v1626
        %1633 = vmatprep.subr.mxu0 0.0
        %1634 = vmatpush1.msra.mxu0 0.0
        %1635 = vmatprep.subr.mxu0 0.0
        %1636 = vmatpush1.msra.mxu0 0.0
        %1637 = vmatprep.subr.mxu0 0.0
        %1638 = vmatpush1.msra.mxu0 0.0
        %1639 = vmatprep.subr.mxu0 0.0
        %1640 = vmatpush1.msra.mxu0 0.0
        %1641 = vmatprep.subr.mxu0 0.0
        %1642 = vmatpush1.msra.mxu0 0.0
        %1643 = vmatprep.subr.mxu0 0.0
        %1644 = vmatpush1.msra.mxu0 0.0
        %1645 = vmatprep.subr.mxu0 0.0
        %1646 = vmatpush1.msra.mxu0 0.0
        %1647 = vmatprep.subr.mxu0 0.0
        %1648 = vmatpush1.msra.mxu0 0.0
        %1649 = vmatprep.subr.mxu0 0.0
        %1650 = vmatpush1.msra.mxu0 0.0
        %1651 = vmatprep.subr.mxu0 0.0
        %1652 = vmatpush1.msra.mxu0 0.0
        %1653 = vmatprep.subr.mxu0 0.0
        %1654 = vmatpush1.msra.mxu0 0.0
        %1655 = vmatprep.subr.mxu0 0.0
        %1656 = vmatpush1.msra.mxu0 0.0
        %1657 = vmatprep.subr.mxu0 0.0
        %1658 = vmatpush1.msra.mxu0 0.0
        %1659 = vmatprep.subr.mxu0 0.0
        %1660 = vmatpush1.msra.mxu0 0.0
        %1661 = vmatprep.subr.mxu0 0.0
        %1662 = vmatpush1.msra.mxu0 0.0
        %1663 = vmatprep.subr.mxu0 0.0
        %1664 = vmatpush1.msra.mxu0 0.0
        %1665 = vmatprep.subr.mxu0 0.0
        %1666 = vmatpush1.msra.mxu0 0.0
        %1667 = vmatprep.subr.mxu0 0.0
        %1668 = vmatpush1.msra.mxu0 0.0
        %1669 = vmatprep.subr.mxu0 0.0
        %1670 = vmatpush1.msra.mxu0 0.0
        %1671 = vmatprep.subr.mxu0 0.0
        %1672 = vmatpush1.msra.mxu0 0.0
        %1673 = vmatprep.subr.mxu0 0.0
        %1674 = vmatpush1.msra.mxu0 0.0
        %1675 = vmatprep.subr.mxu0 0.0
        %1676 = vmatpush1.msra.mxu0 0.0
        %1677 = vmatprep.subr.mxu0 0.0
        %1678 = vmatpush1.msra.mxu0 0.0
        %1679 = vmatprep.subr.mxu0 0.0
        %1680 = vmatpush1.msra.mxu0 0.0
        %1681 = vmatprep.subr.mxu0 0.0
        %1682 = vmatpush1.msra.mxu0 0.0
        %1683 = vmatprep.subr.mxu0 0.0
        %1684 = vmatpush1.msra.mxu0 0.0
        %1685 = vmatprep.subr.mxu0 0.0
        %1686 = vmatpush1.msra.mxu0 0.0
        %1687 = vmatprep.subr.mxu0 0.0
        %1688 = vmatpush1.msra.mxu0 0.0
        %1689 = vmatprep.subr.mxu0 0.0
        %1690 = vmatpush1.msra.mxu0 0.0
        %1691 = vmatprep.subr.mxu0 0.0
        %1692 = vmatpush1.msra.mxu0 0.0
        %1693 = vmatprep.subr.mxu0 0.0
        %1694 = vmatpush1.msra.mxu0 0.0
        %1695 = vmatprep.mubr.f32.mxu0 0.0
        %1696 = vmatmul.mubr.f32.gmra.mrb[0].mxu0 %v1629
        %v1697 = vpop.f32.mrb[0].mxu0
        %v1698 = vadd.f32 0.0, %v1697
        %v1699 = vpop.f32.mrb[0].mxu0
        %1700 = vdwg.mxu0
        %1702 = vrot.lane.b32.xlu0 %v1698, 24
        %v1703 = vpop.permute.xlu0 %1702
        %vm1705 = vcmask 261312
        %1706 = vst.msk [vmem:[#allocation2] sm:$0xff] %vm1705, %v1703
        %v1707 = vld [vmem:[#allocation2] sm:$0xff]
        %v1708 = vld [vmem:[#allocation15] sm:$0xff]
        %v1709 = vld [vmem:[#allocation15 + $0x8] sm:$0xff]
        %v1710 = vld [vmem:[#allocation15 + $0x10] sm:$0xff]
        %v1711 = vld [vmem:[#allocation15 + $0x18] sm:$0xff]
        %v1713 = vlaneseq
        %v1714 = vshrl.u32 %v1713, 7
        %v1715 = vsub.s32 0, %v1714
        %v1716 = vrot.slane %v779, %v1715
        %v1719 = vsel %vm797, %v1707, 0
        %1721 = vmatprep.subr.mxu0 0.0
        %1722 = vmatpush1.msra.mxu0 %v1708
        %1723 = vmatprep.subr.mxu0 0.0
        %1724 = vmatpush1.msra.mxu0 %v1709
        %1725 = vmatprep.subr.mxu0 0.0
        %1726 = vmatpush1.msra.mxu0 %v1710
        %1727 = vmatprep.subr.mxu0 0.0
        %1728 = vmatpush1.msra.mxu0 %v1711
        %1729 = vmatprep.subr.mxu0 0.0
        %1730 = vmatpush1.msra.mxu0 0.0
        %1731 = vmatprep.subr.mxu0 0.0
        %1732 = vmatpush1.msra.mxu0 0.0
        %1733 = vmatprep.subr.mxu0 0.0
        %1734 = vmatpush1.msra.mxu0 0.0
        %1735 = vmatprep.subr.mxu0 0.0
        %1736 = vmatpush1.msra.mxu0 0.0
        %1737 = vmatprep.subr.mxu0 0.0
        %1738 = vmatpush1.msra.mxu0 0.0
        %1739 = vmatprep.subr.mxu0 0.0
        %1740 = vmatpush1.msra.mxu0 0.0
        %1741 = vmatprep.subr.mxu0 0.0
        %1742 = vmatpush1.msra.mxu0 0.0
        %1743 = vmatprep.subr.mxu0 0.0
        %1744 = vmatpush1.msra.mxu0 0.0
        %1745 = vmatprep.subr.mxu0 0.0
        %1746 = vmatpush1.msra.mxu0 0.0
        %1747 = vmatprep.subr.mxu0 0.0
        %1748 = vmatpush1.msra.mxu0 0.0
        %1749 = vmatprep.subr.mxu0 0.0
        %1750 = vmatpush1.msra.mxu0 0.0
        %1751 = vmatprep.subr.mxu0 0.0
        %1752 = vmatpush1.msra.mxu0 0.0
        %1753 = vmatprep.subr.mxu0 0.0
        %1754 = vmatpush1.msra.mxu0 0.0
        %1755 = vmatprep.subr.mxu0 0.0
        %1756 = vmatpush1.msra.mxu0 0.0
        %1757 = vmatprep.subr.mxu0 0.0
        %1758 = vmatpush1.msra.mxu0 0.0
        %1759 = vmatprep.subr.mxu0 0.0
        %1760 = vmatpush1.msra.mxu0 0.0
        %1761 = vmatprep.subr.mxu0 0.0
        %1762 = vmatpush1.msra.mxu0 0.0
        %1763 = vmatprep.subr.mxu0 0.0
        %1764 = vmatpush1.msra.mxu0 0.0
        %1765 = vmatprep.subr.mxu0 0.0
        %1766 = vmatpush1.msra.mxu0 0.0
        %1767 = vmatprep.subr.mxu0 0.0
        %1768 = vmatpush1.msra.mxu0 0.0
        %1769 = vmatprep.subr.mxu0 0.0
        %1770 = vmatpush1.msra.mxu0 0.0
        %1771 = vmatprep.subr.mxu0 0.0
        %1772 = vmatpush1.msra.mxu0 0.0
        %1773 = vmatprep.subr.mxu0 0.0
        %1774 = vmatpush1.msra.mxu0 0.0
        %1775 = vmatprep.subr.mxu0 0.0
        %1776 = vmatpush1.msra.mxu0 0.0
        %1777 = vmatprep.subr.mxu0 0.0
        %1778 = vmatpush1.msra.mxu0 0.0
        %1779 = vmatprep.subr.mxu0 0.0
        %1780 = vmatpush1.msra.mxu0 0.0
        %1781 = vmatprep.subr.mxu0 0.0
        %1782 = vmatpush1.msra.mxu0 0.0
        %1783 = vmatprep.subr.mxu0 0.0
        %1784 = vmatpush1.msra.mxu0 0.0
        %1785 = vmatprep.mubr.f32.mxu0 0.0
        %1786 = vmatmul.mubr.f32.gmra.mrb[0].mxu0 %v1719
        %v1787 = vpop.f32.mrb[0].mxu0
        %v1788 = vadd.f32 %v1716, %v1787
        %v1789 = vpop.f32.mrb[0].mxu0
        %1790 = vdwg.mxu0
        %v1791 = vadd.f32 %v1788, %v786
        %v1792 = vsel %vm797, %v1791, 0.0
        %1793 = vadd.xlane.f32.xlu0 %v1792
        %v1794 = vpop.xlane.xlu0 %1793
        %v1795 = vrcp.pop 32.0
        %v1796 = vmul.f32 %v1794, %v1795
        %v1797 = vsub.f32 %v1791, %v1796
        %v1798 = vmul.f32 %v1797, %v1797
        %v1799 = vsel %vm797, %v1798, 0.0
        %1800 = vadd.xlane.f32.xlu0 %v1799
        %v1801 = vpop.xlane.xlu0 %1800
        %v1802 = vmul.f32 %v1801, %v1795
        %v1803 = vadd.f32 %v1802, 1e-05
        %v1804 = vrsqrt.pop %v1803
        %v1805 = vmul.f32 %v1797, %v1804
        %v1807 = vlaneseq
        %v1808 = vshrl.u32 %v1807, 7
        %v1809 = vsub.s32 0, %v1808
        %v1810 = vrot.slane %v781, %v1809
        %v1812 = vmul.f32 %v1805, %v1810
        %v1814 = vlaneseq
        %v1815 = vshrl.u32 %v1814, 7
        %v1816 = vsub.s32 0, %v1815
        %v1817 = vrot.slane %v782, %v1816
        %v1819 = vadd.f32 %v1812, %v1817
        %v1820 = vld [vmem:[#allocation21] sm:$0xff]
        %v1821 = vld [vmem:[#allocation21 + $0x8] sm:$0xff]
        %v1822 = vld [vmem:[#allocation21 + $0x10] sm:$0xff]
        %v1823 = vld [vmem:[#allocation21 + $0x18] sm:$0xff]
        %v1825 = vlaneseq
        %v1826 = vshrl.u32 %v1825, 7
        %v1827 = vsub.s32 0, %v1826
        %v1828 = vrot.slane %v785, %v1827
        %v1831 = vsel %vm797, %v1819, 0
        %1833 = vmatprep.subr.mxu0 0.0
        %1834 = vmatpush1.msra.mxu0 %v1820
        %1835 = vmatprep.subr.mxu0 0.0
        %1836 = vmatpush1.msra.mxu0 %v1821
        %1837 = vmatprep.subr.mxu0 0.0
        %1838 = vmatpush1.msra.mxu0 %v1822
        %1839 = vmatprep.subr.mxu0 0.0
        %1840 = vmatpush1.msra.mxu0 %v1823
        %1841 = vmatprep.subr.mxu0 0.0
        %1842 = vmatpush1.msra.mxu0 0.0
        %1843 = vmatprep.subr.mxu0 0.0
        %1844 = vmatpush1.msra.mxu0 0.0
        %1845 = vmatprep.subr.mxu0 0.0
        %1846 = vmatpush1.msra.mxu0 0.0
        %1847 = vmatprep.subr.mxu0 0.0
        %1848 = vmatpush1.msra.mxu0 0.0
        %1849 = vmatprep.subr.mxu0 0.0
        %1850 = vmatpush1.msra.mxu0 0.0
        %1851 = vmatprep.subr.mxu0 0.0
        %1852 = vmatpush1.msra.mxu0 0.0
        %1853 = vmatprep.subr.mxu0 0.0
        %1854 = vmatpush1.msra.mxu0 0.0
        %1855 = vmatprep.subr.mxu0 0.0
        %1856 = vmatpush1.msra.mxu0 0.0
        %1857 = vmatprep.subr.mxu0 0.0
        %1858 = vmatpush1.msra.mxu0 0.0
        %1859 = vmatprep.subr.mxu0 0.0
        %1860 = vmatpush1.msra.mxu0 0.0
        %1861 = vmatprep.subr.mxu0 0.0
        %1862 = vmatpush1.msra.mxu0 0.0
        %1863 = vmatprep.subr.mxu0 0.0
        %1864 = vmatpush1.msra.mxu0 0.0
        %1865 = vmatprep.subr.mxu0 0.0
        %1866 = vmatpush1.msra.mxu0 0.0
        %1867 = vmatprep.subr.mxu0 0.0
        %1868 = vmatpush1.msra.mxu0 0.0
        %1869 = vmatprep.subr.mxu0 0.0
        %1870 = vmatpush1.msra.mxu0 0.0
        %1871 = vmatprep.subr.mxu0 0.0
        %1872 = vmatpush1.msra.mxu0 0.0
        %1873 = vmatprep.subr.mxu0 0.0
        %1874 = vmatpush1.msra.mxu0 0.0
        %1875 = vmatprep.subr.mxu0 0.0
        %1876 = vmatpush1.msra.mxu0 0.0
        %1877 = vmatprep.subr.mxu0 0.0
        %1878 = vmatpush1.msra.mxu0 0.0
        %1879 = vmatprep.subr.mxu0 0.0
        %1880 = vmatpush1.msra.mxu0 0.0
        %1881 = vmatprep.subr.mxu0 0.0
        %1882 = vmatpush1.msra.mxu0 0.0
        %1883 = vmatprep.subr.mxu0 0.0
        %1884 = vmatpush1.msra.mxu0 0.0
        %1885 = vmatprep.subr.mxu0 0.0
        %1886 = vmatpush1.msra.mxu0 0.0
        %1887 = vmatprep.subr.mxu0 0.0
        %1888 = vmatpush1.msra.mxu0 0.0
        %1889 = vmatprep.subr.mxu0 0.0
        %1890 = vmatpush1.msra.mxu0 0.0
        %1891 = vmatprep.subr.mxu0 0.0
        %1892 = vmatpush1.msra.mxu0 0.0
        %1893 = vmatprep.subr.mxu0 0.0
        %1894 = vmatpush1.msra.mxu0 0.0
        %1895 = vmatprep.subr.mxu0 0.0
        %1896 = vmatpush1.msra.mxu0 0.0
        %1897 = vmatprep.mubr.f32.mxu0 0.0
        %1898 = vmatmul.mubr.f32.gmra.mrb[0].mxu0 %v1831
        %v1899 = vpop.f32.mrb[0].mxu0
        %v1900 = vadd.f32 %v1828, %v1899
        %v1901 = vpop.f32.mrb[0].mxu0
        %1902 = vdwg.mxu0
        %v1903 = vmax.f32 %v1900, 0.0
        %v1904 = vld [vmem:[#allocation24] sm:$0xff]
        %v1905 = vld [vmem:[#allocation24 + $0x8] sm:$0xff]
        %v1906 = vld [vmem:[#allocation24 + $0x10] sm:$0xff]
        %v1907 = vld [vmem:[#allocation24 + $0x18] sm:$0xff]
        %v1908 = vld [vmem:[#allocation24 + $0x20] sm:$0xff]
        %v1909 = vld [vmem:[#allocation24 + $0x28] sm:$0xff]
        %v1910 = vld [vmem:[#allocation24 + $0x30] sm:$0xff]
        %v1911 = vld [vmem:[#allocation24 + $0x38] sm:$0xff]
        %v1913 = vlaneseq
        %v1914 = vshrl.u32 %v1913, 7
        %v1915 = vsub.s32 0, %v1914
        %v1916 = vrot.slane %v780, %v1915
        %vm1918 = vcmask 523264
        %v1920 = vsel %vm1918, %v1903, 0
        %1922 = vmatprep.subr.mxu0 0.0
        %1923 = vmatpush1.msra.mxu0 %v1904
        %1924 = vmatprep.subr.mxu0 0.0
        %1925 = vmatpush1.msra.mxu0 %v1905
        %1926 = vmatprep.subr.mxu0 0.0
        %1927 = vmatpush1.msra.mxu0 %v1906
        %1928 = vmatprep.subr.mxu0 0.0
        %1929 = vmatpush1.msra.mxu0 %v1907
        %1930 = vmatprep.subr.mxu0 0.0
        %1931 = vmatpush1.msra.mxu0 %v1908
        %1932 = vmatprep.subr.mxu0 0.0
        %1933 = vmatpush1.msra.mxu0 %v1909
        %1934 = vmatprep.subr.mxu0 0.0
        %1935 = vmatpush1.msra.mxu0 %v1910
        %1936 = vmatprep.subr.mxu0 0.0
        %1937 = vmatpush1.msra.mxu0 %v1911
        %1938 = vmatprep.subr.mxu0 0.0
        %1939 = vmatpush1.msra.mxu0 0.0
        %1940 = vmatprep.subr.mxu0 0.0
        %1941 = vmatpush1.msra.mxu0 0.0
        %1942 = vmatprep.subr.mxu0 0.0
        %1943 = vmatpush1.msra.mxu0 0.0
        %1944 = vmatprep.subr.mxu0 0.0
        %1945 = vmatpush1.msra.mxu0 0.0
        %1946 = vmatprep.subr.mxu0 0.0
        %1947 = vmatpush1.msra.mxu0 0.0
        %1948 = vmatprep.subr.mxu0 0.0
        %1949 = vmatpush1.msra.mxu0 0.0
        %1950 = vmatprep.subr.mxu0 0.0
        %1951 = vmatpush1.msra.mxu0 0.0
        %1952 = vmatprep.subr.mxu0 0.0
        %1953 = vmatpush1.msra.mxu0 0.0
        %1954 = vmatprep.subr.mxu0 0.0
        %1955 = vmatpush1.msra.mxu0 0.0
        %1956 = vmatprep.subr.mxu0 0.0
        %1957 = vmatpush1.msra.mxu0 0.0
        %1958 = vmatprep.subr.mxu0 0.0
        %1959 = vmatpush1.msra.mxu0 0.0
        %1960 = vmatprep.subr.mxu0 0.0
        %1961 = vmatpush1.msra.mxu0 0.0
        %1962 = vmatprep.subr.mxu0 0.0
        %1963 = vmatpush1.msra.mxu0 0.0
        %1964 = vmatprep.subr.mxu0 0.0
        %1965 = vmatpush1.msra.mxu0 0.0
        %1966 = vmatprep.subr.mxu0 0.0
        %1967 = vmatpush1.msra.mxu0 0.0
        %1968 = vmatprep.subr.mxu0 0.0
        %1969 = vmatpush1.msra.mxu0 0.0
        %1970 = vmatprep.subr.mxu0 0.0
        %1971 = vmatpush1.msra.mxu0 0.0
        %1972 = vmatprep.subr.mxu0 0.0
        %1973 = vmatpush1.msra.mxu0 0.0
        %1974 = vmatprep.subr.mxu0 0.0
        %1975 = vmatpush1.msra.mxu0 0.0
        %1976 = vmatprep.subr.mxu0 0.0
        %1977 = vmatpush1.msra.mxu0 0.0
        %1978 = vmatprep.subr.mxu0 0.0
        %1979 = vmatpush1.msra.mxu0 0.0
        %1980 = vmatprep.subr.mxu0 0.0
        %1981 = vmatpush1.msra.mxu0 0.0
        %1982 = vmatprep.subr.mxu0 0.0
        %1983 = vmatpush1.msra.mxu0 0.0
        %1984 = vmatprep.subr.mxu0 0.0
        %1985 = vmatpush1.msra.mxu0 0.0
        %1986 = vmatprep.mubr.f32.mxu0 0.0
        %1987 = vmatmul.mubr.f32.gmra.mrb[0].mxu0 %v1920
        %v1988 = vpop.f32.mrb[0].mxu0
        %v1989 = vadd.f32 %v1916, %v1988
        %v1990 = vpop.f32.mrb[0].mxu0
        %1991 = vdwg.mxu0
        %v1992 = vadd.f32 %v1989, %v1819
        %v1993 = vsel %vm797, %v1992, 0.0
        %1994 = vadd.xlane.f32.xlu0 %v1993
        %v1995 = vpop.xlane.xlu0 %1994
        %v1996 = vmul.f32 %v1995, %v1795
        %v1997 = vsub.f32 %v1992, %v1996
        %v1998 = vmul.f32 %v1997, %v1997
        %v1999 = vsel %vm797, %v1998, 0.0
        %2000 = vadd.xlane.f32.xlu0 %v1999
        %v2001 = vpop.xlane.xlu0 %2000
        %v2002 = vmul.f32 %v2001, %v1795
        %v2003 = vadd.f32 %v2002, 1e-05
        %v2004 = vrsqrt.pop %v2003
        %v2005 = vmul.f32 %v1997, %v2004
        %v2007 = vlaneseq
        %v2008 = vshrl.u32 %v2007, 7
        %v2009 = vsub.s32 0, %v2008
        %v2010 = vrot.slane %v783, %v2009
        %v2012 = vmul.f32 %v2005, %v2010
        %v2014 = vlaneseq
        %v2015 = vshrl.u32 %v2014, 7
        %v2016 = vsub.s32 0, %v2015
        %v2017 = vrot.slane %v784, %v2016
        %v2019 = vadd.f32 %v2012, %v2017
        %2020 = vst.msk [vmem:[%s775] sm:$0xff] %vm797, %v2019
        %s2021 = sand.u32 %s412, 1
        %s2022 = scalar_lea.sflag [#allocation5], %s2021
        %s2023 = sand.u32 %s412, 1
        %s2024 = smul.addr %s2023, 8
        %s2025 = scalar_lea.vmem [#allocation30], %s2024
        // Predicated region
        $region157: #{tpu_custom_call.1} parent=87 // pred_check
          %p2026 = pneg %p422
        $region158: #{tpu_custom_call.1} parent=87 // pred_check_branch
          %2028 = sbr.rel (%p2026) target = $region160
        $region159: #{tpu_custom_call.1} parent=87 // pred_region
          %s2030 = ssub.s32 128, 128
          %2031 = vsyncadd %s2022, %s2030
          %s2032 = smul.addr %s42, 128
          %s2033 = scalar_lea.hbm %s17, %s2032
          %s2035 = sshll.u32 %s2025, 4
          %s2036 = int_to_ptr.vmem [resolvable:$true] %s2035
          %2038 = dma.vmem_to_hbm [thread:$0]  %s2036, 128, %s2033, %s2022
        $region160: #{tpu_custom_call.1} parent=87 // pred_fallthru
          _
      $region88: #{tpu_custom_call.1} parent=5 // pred_fallthru
        _
      %p2039 = scmp.le.s32.totalorder 2, %s37
      // Predicated region
      $region161: #{tpu_custom_call.1} parent=5 // pred_check
        %p2040 = pneg %p2039
      $region162: #{tpu_custom_call.1} parent=5 // pred_check_branch
        %2042 = sbr.rel (%p2040) target = $region164
      $region163: #{tpu_custom_call.1} parent=5 // pred_region
        %s2043 = ssub.s32 %s37, 2
        // Predicated region
        $region165: #{tpu_custom_call.1} parent=163 // pred_check
          %p2044 = pneg %p428
        $region166: #{tpu_custom_call.1} parent=163 // pred_check_branch
          %2046 = sbr.rel (%p2044) target = $region168
        $region167: #{tpu_custom_call.1} parent=163 // pred_region
          %s2047 = sand.u32 %s413, 1
          %s2048 = scalar_lea.sflag [#allocation5], %s2047
          %s2049 = sand.u32 %s413, 1
          %s2050 = smul.addr %s2049, 8
          %s2051 = scalar_lea.vmem [#allocation30], %s2050
          %2052 = dma.done %s2048, 128
        $region168: #{tpu_custom_call.1} parent=163 // pred_fallthru
          _
      $region164: #{tpu_custom_call.1} parent=5 // pred_fallthru
        _
    $region6: #{tpu_custom_call.1} parent=1 // loop_footer
      %s41 = sadd.s32 1, %s37
    $region7: #{tpu_custom_call.1} parent=1 // loop_footer_branch
      %36 = sbr.rel target = $region3
    $region8: #{tpu_custom_call.1} parent=1 // loop_exit
      _
    %2053 = vsyncpa [#allocation4], 1
    %s2054 = scalar_lea.sflag [#allocation4], 1
    %2055 = vsyncpa %s2054, 1
    %2056 = vsyncpa [#allocation7], 1
    %2057 = vsyncpa [#allocation10], 1
    %2058 = vsyncpa [#allocation13], 1
    %2059 = vsyncpa [#allocation16], 1
    %2060 = vsyncpa [#allocation19], 1
    %2061 = vsyncpa [#allocation22], 1
    %2062 = vsyncpa [#allocation25], 1
    %2063 = vsyncpa [#allocation28], 1
    %2064 = vsyncpa [#allocation5], 1
    %s2065 = scalar_lea.sflag [#allocation5], 1
    %2066 = vsyncpa %s2065, 1

</llo_original>
